<compile_context>
chip_gen: v5e
topology: v5e:2x2
jax: 0.10.0
libtpu: 0.0.40
codegen_flags: <defaults>
</compile_context>

<pallas_src>
import jax
import jax.numpy as jnp
from jax import lax
from jax.experimental import pallas as pl
from jax.experimental.pallas import tpu as pltpu

HIDDEN = 768          # fixed by the PyTorch module (768 * 2 concat)
MID = 256
NUM_CLASSES = 9
PAD_CLASSES = 128     # lane-dense padded class dim
ID_DICT_LEN = 100     # cfg.ID_DICT_LEN (synthetic)
VOCAB = 1000          # stand-in backbone vocab
LN_EPS = 1e-5         # nn.LayerNorm default
NEG_BIG = -1e30       # bias for padded softmax columns -> exp() == 0


# ----------------------------------------------------------------------------
# Fused Pallas kernel:
#   pooler = tanh(pooled @ Wp + bp)
#   h      = pooler @ W1a + id_contrib + b1        (id_contrib = id_vec @ W1b)
#   ln     = (h - mean) * rsqrt(var + eps)          (affine folded into W2/b2)
#   probs  = softmax(ln @ W2' + b2')                (128-wide, pads -> 0)
# ----------------------------------------------------------------------------
def head_kernel(pooled_ref, idc_ref, pw_ref, pb_ref, w1_ref, b1_ref,
                w2_ref, b2_ref, out_ref):
    # stand-in pooler dense + tanh  (bf16 MXU, f32 accumulate)
    pooler = jnp.tanh(
        jnp.dot(pooled_ref[...], pw_ref[...],
                preferred_element_type=jnp.float32)
        + pb_ref[...])                                               # (TM, 768) f32

    # Linear(1536,256) with the concat split: pooler part on the MXU, id part
    # arrives pre-projected as bf16 id_contrib (exact fold of id_vec @ W1[768:]).
    h = (jnp.dot(pooler.astype(jnp.bfloat16), w1_ref[...],
                 preferred_element_type=jnp.float32)
         + idc_ref[...].astype(jnp.float32) + b1_ref[...])           # (TM, 256) f32

    # LayerNorm(256) -- gamma/beta folded into W2/b2 by the wrapper.
    mean = jnp.mean(h, axis=-1, keepdims=True)
    c = h - mean
    var = jnp.mean(c * c, axis=-1, keepdims=True)
    ln = c * lax.rsqrt(var + LN_EPS)                                 # (TM, 256) f32

    # Linear(256, 9) padded to 128 lanes; pad columns carry a -1e30 bias.
    logits = (jnp.dot(ln.astype(jnp.bfloat16), w2_ref[...],
                      preferred_element_type=jnp.float32)
              + b2_ref[...])                                         # (TM, 128) f32

    # Softmax over the class dim (pad columns contribute exp(-1e30) == 0).
    m = jnp.max(logits, axis=-1, keepdims=True)
    e = jnp.exp(logits - m)
    inv = pl.reciprocal(jnp.sum(e, axis=-1, keepdims=True), approx=False)
    out_ref[...] = (e * inv).astype(out_ref.dtype)                   # bf16 store


def _chip_config():
    """Generation-aware (num_cores_per_chip, default batch tile)."""
    num_cores, tile = 1, 1024          # safe for v5e's 16 MiB scoped VMEM default
    try:
        kind = jax.devices()[0].device_kind.lower()
    except Exception:
        kind = ""
    if "v6" in kind:                   # v6e: 32 MiB scoped default, mem-bound
        tile = 2048
    if "v7" in kind or "7x" in kind:   # v7x: 2 TensorCores, 64 MiB VMEM
        tile = 2048
        num_cores = 2
    return num_cores, tile


def head_forward(pooled_bf16, idc_bf16, pw_bf16, pb, w1a_bf16, b1,
                 w2p_bf16, b2p, *, tm=None):
    """Batch-tiled fused head.  Returns the padded (B, 128) bf16 prob slab."""
    B = pooled_bf16.shape[0]
    num_cores, tile_default = _chip_config()
    if tm is None:
        tm = tile_default

    if B <= 8:
        TM = B                                   # block == full dim (legal)
    else:
        # >= num_cores grid steps when possible (keeps both v7x TCs busy),
        # sublane-aligned (multiple of 8); ragged last tile handled by cdiv.
        target = min(tm, -(-B // num_cores))
        TM = max(8, (target // 8) * 8)
    grid = (pl.cdiv(B, TM),)

    row = lambda w: pl.BlockSpec((TM, w), lambda i: (i, 0))     # streamed
    res = lambda s: pl.BlockSpec(s, lambda i: (0, 0))           # weight-resident

    out = pl.pallas_call(
        head_kernel,
        out_shape=jax.ShapeDtypeStruct((B, PAD_CLASSES), jnp.bfloat16),
        grid=grid,
        in_specs=[
            row(HIDDEN),                 # pooled          (TM, 768)  bf16
            row(MID),                    # id_contrib      (TM, 256)  bf16
            res((HIDDEN, HIDDEN)),       # pooler_w        bf16
            res((1, HIDDEN)),            # pooler_b        f32
            res((HIDDEN, MID)),          # W1[:768]        bf16
            res((1, MID)),               # b1              f32
            res((MID, PAD_CLASSES)),     # W2' padded      bf16
            res((1, PAD_CLASSES)),       # b2' padded      f32
        ],
        out_specs=pl.BlockSpec((TM, PAD_CLASSES), lambda i: (i, 0)),
        compiler_params=pltpu.CompilerParams(
            dimension_semantics=("parallel",)),
    )(pooled_bf16, idc_bf16, pw_bf16, pb, w1a_bf16, b1, w2p_bf16, b2p)

    return out


# ----------------------------------------------------------------------------
# Parameter init (deterministic, PyTorch-default-style)
# ----------------------------------------------------------------------------
def init_params(key):
    ks = jax.random.split(key, 8)

    # stand-in backbone
    tok_emb = jax.random.normal(ks[0], (VOCAB, HIDDEN), jnp.float32) * 0.02
    pooler_w = jax.random.uniform(ks[1], (HIDDEN, HIDDEN), jnp.float32,
                                  -1.0 / jnp.sqrt(HIDDEN), 1.0 / jnp.sqrt(HIDDEN))
    pooler_b = jnp.zeros((HIDDEN,), jnp.float32)

    # nn.Embedding(ID_DICT_LEN, 768, padding_idx=1) -> row 1 is zeros
    id_emb = jax.random.normal(ks[2], (ID_DICT_LEN, HIDDEN), jnp.float32)
    id_emb = id_emb.at[1].set(0.0)

    # nn.Linear(1536, 256)
    bound1 = 1.0 / jnp.sqrt(2 * HIDDEN)
    w1 = jax.random.uniform(ks[3], (2 * HIDDEN, MID), jnp.float32, -bound1, bound1)
    b1 = jax.random.uniform(ks[4], (1, MID), jnp.float32, -bound1, bound1)

    # nn.LayerNorm(256)
    gamma = jnp.ones((1, MID), jnp.float32)
    beta = jnp.zeros((1, MID), jnp.float32)

    # nn.Linear(256, 9)
    bound2 = 1.0 / jnp.sqrt(MID)
    w2 = jax.random.uniform(ks[5], (MID, NUM_CLASSES), jnp.float32, -bound2, bound2)
    b2 = jax.random.uniform(ks[6], (1, NUM_CLASSES), jnp.float32, -bound2, bound2)

    return dict(tok_emb=tok_emb, pooler_w=pooler_w, pooler_b=pooler_b,
                id_emb=id_emb, w1=w1, b1=b1, gamma=gamma, beta=beta,
                w2=w2, b2=b2)


# ----------------------------------------------------------------------------
# Param-only preprocessing: LN-affine fold, class padding, id-proj table, bf16.
# Called ONCE (hoisted out of the per-forward path per the perf review).
# ----------------------------------------------------------------------------
def prepare_head(params):
    # Fold LayerNorm affine into Linear(256,9):  (ln*g + b) @ W2 + b2
    #   = ln @ (g[:,None]*W2) + (b @ W2 + b2)
    w2f = params["gamma"].reshape(MID, 1) * params["w2"]             # (256, 9)
    b2f = params["beta"] @ params["w2"] + params["b2"]               # (1, 9)
    w2p = jnp.zeros((MID, PAD_CLASSES), jnp.float32).at[:, :NUM_CLASSES].set(w2f)
    b2p = jnp.full((1, PAD_CLASSES), NEG_BIG, jnp.float32).at[:, :NUM_CLASSES].set(b2f)

    # id_vec @ W1[768:]  ==  (id_emb @ W1[768:])[ids]  -> (100,256) bf16 table.
    id_proj = (params["id_emb"] @ params["w1"][HIDDEN:]).astype(jnp.bfloat16)

    return dict(
        tok_emb=params["tok_emb"].astype(jnp.bfloat16),
        pw=params["pooler_w"].astype(jnp.bfloat16),
        pb=params["pooler_b"].reshape(1, HIDDEN),
        w1a=params["w1"][:HIDDEN].astype(jnp.bfloat16),
        b1=params["b1"],
        w2p=w2p.astype(jnp.bfloat16),
        b2p=b2p,
        id_proj=id_proj,
    )


# ----------------------------------------------------------------------------
# Full forward (glue in plain JAX, fused head in Pallas)
# ----------------------------------------------------------------------------
def custom_model_forward(head, input_ids, attention_mask, ids):
    # ---- stand-in backbone: bf16 token embedding + masked mean pool (glue) ----
    # TODO(synk): replace with the real pretrained transformer when available.
    emb = jnp.take(head["tok_emb"], input_ids, axis=0)               # (B, S, 768) bf16
    mask = attention_mask.astype(jnp.float32)[..., None]             # (B, S, 1)
    pooled = (jnp.sum(emb.astype(jnp.float32) * mask, axis=1)
              / jnp.maximum(jnp.sum(mask, axis=1), 1.0))             # (B, 768) f32

    # id branch pre-projected to 256-d bf16 (exact fold of id_emb[ids] @ W1[768:]).
    id_contrib = jnp.take(head["id_proj"], ids, axis=0)              # (B, 256) bf16

    # ---- fused Pallas head: pooler dense+tanh -> Linear -> LN -> Linear -> softmax
    probs_pad = head_forward(pooled.astype(jnp.bfloat16), id_contrib,
                             head["pw"], head["pb"], head["w1a"], head["b1"],
                             head["w2p"], head["b2p"])               # (B, 128) bf16
    return probs_pad[:, :NUM_CLASSES].astype(jnp.float32)            # (B, 9) f32


if __name__ == "__main__":
    key = jax.random.PRNGKey(0)
    pkey, k_ids, k_mask, k_id = jax.random.split(key, 4)

    params = init_params(pkey)
    head = prepare_head(params)          # hoisted: param-only prep runs once

    B, S = 2, 8
    input_ids = jax.random.randint(k_ids, (B, S), 0, VOCAB, dtype=jnp.int32)
    attention_mask = jnp.ones((B, S), dtype=jnp.int32)
    ids = jax.random.randint(k_id, (B,), 0, ID_DICT_LEN, dtype=jnp.int32)

    probs = custom_model_forward(head, input_ids, attention_mask, ids)
    probs = jax.block_until_ready(probs)

    assert probs.shape == (B, NUM_CLASSES)
    assert bool(jnp.all(jnp.isfinite(probs)))
    # softmax rows should sum to ~1 (bf16-stored probabilities -> loose tol)
    assert bool(jnp.allclose(jnp.sum(probs, axis=-1), 1.0, atol=1e-2))
    print("KERNEL_OK")
</pallas_src>

<mosaic_0001>
module attributes {stable_mosaic.version = 11 : i64} {
  func.func @head_kernel(%arg0: i32, %arg1: memref<2x768xbf16, #tpu.memory_space<vmem>>, %arg2: memref<2x256xbf16, #tpu.memory_space<vmem>>, %arg3: memref<768x768xbf16, #tpu.memory_space<vmem>>, %arg4: memref<1x768xf32, #tpu.memory_space<vmem>>, %arg5: memref<768x256xbf16, #tpu.memory_space<vmem>>, %arg6: memref<1x256xf32, #tpu.memory_space<vmem>>, %arg7: memref<256x128xbf16, #tpu.memory_space<vmem>>, %arg8: memref<1x128xf32, #tpu.memory_space<vmem>>, %arg9: memref<2x128xbf16, #tpu.memory_space<vmem>>) attributes {dimension_semantics = [#tpu.dimension_semantics<parallel>], iteration_bounds = array<i64: 1>, scalar_prefetch = 0 : i64, scratch_operands = 0 : i64, tpu.core_type = #tpu.core_type<tc>, window_params = [{transform_indices = @transform_0, window_bounds = array<i64: 2, 768>}, {transform_indices = @transform_1, window_bounds = array<i64: 2, 256>}, {pipeline_mode = #tpu.pipeline_mode<synchronous>, transform_indices = @transform_2, window_bounds = array<i64: 768, 768>}, {pipeline_mode = #tpu.pipeline_mode<synchronous>, transform_indices = @transform_3, window_bounds = array<i64: 1, 768>}, {pipeline_mode = #tpu.pipeline_mode<synchronous>, transform_indices = @transform_4, window_bounds = array<i64: 768, 256>}, {pipeline_mode = #tpu.pipeline_mode<synchronous>, transform_indices = @transform_5, window_bounds = array<i64: 1, 256>}, {pipeline_mode = #tpu.pipeline_mode<synchronous>, transform_indices = @transform_6, window_bounds = array<i64: 256, 128>}, {pipeline_mode = #tpu.pipeline_mode<synchronous>, transform_indices = @transform_7, window_bounds = array<i64: 1, 128>}, {transform_indices = @transform_8, window_bounds = array<i64: 2, 128>}]} {
    %c0 = arith.constant 0 : index
    %c0_0 = arith.constant 0 : index
    %0 = vector.load %arg1[%c0, %c0_0] : memref<2x768xbf16, #tpu.memory_space<vmem>>, vector<2x768xbf16>
    %c0_1 = arith.constant 0 : index
    %c0_2 = arith.constant 0 : index
    %1 = vector.load %arg3[%c0_1, %c0_2] : memref<768x768xbf16, #tpu.memory_space<vmem>>, vector<768x768xbf16>
    %cst = arith.constant dense<0.000000e+00> : vector<2x768xf32>
    %2 = tpu.matmul %0, %1, %cst {dimension_numbers = #tpu.dot_dimension_numbers<[1], [0], [0], [1], [0, 0, 1, 1], [], []>} : vector<2x768xbf16>, vector<768x768xbf16>, vector<2x768xf32> -> vector<2x768xf32>
    %c0_3 = arith.constant 0 : index
    %c0_4 = arith.constant 0 : index
    %3 = vector.load %arg4[%c0_3, %c0_4] : memref<1x768xf32, #tpu.memory_space<vmem>>, vector<1x768xf32>
    %4 = vector.broadcast %3 : vector<1x768xf32> to vector<2x768xf32>
    %5 = arith.addf %2, %4 : vector<2x768xf32>
    %6 = math.tanh %5 : vector<2x768xf32>
    %7 = arith.truncf %6 : vector<2x768xf32> to vector<2x768xbf16>
    %c0_5 = arith.constant 0 : index
    %c0_6 = arith.constant 0 : index
    %8 = vector.load %arg5[%c0_5, %c0_6] : memref<768x256xbf16, #tpu.memory_space<vmem>>, vector<768x256xbf16>
    %cst_7 = arith.constant dense<0.000000e+00> : vector<2x256xf32>
    %9 = tpu.matmul %7, %8, %cst_7 {dimension_numbers = #tpu.dot_dimension_numbers<[1], [0], [0], [1], [0, 0, 1, 1], [], []>} : vector<2x768xbf16>, vector<768x256xbf16>, vector<2x256xf32> -> vector<2x256xf32>
    %c0_8 = arith.constant 0 : index
    %c0_9 = arith.constant 0 : index
    %10 = vector.load %arg2[%c0_8, %c0_9] : memref<2x256xbf16, #tpu.memory_space<vmem>>, vector<2x256xbf16>
    %11 = arith.extf %10 : vector<2x256xbf16> to vector<2x256xf32>
    %12 = arith.addf %9, %11 : vector<2x256xf32>
    %c0_10 = arith.constant 0 : index
    %c0_11 = arith.constant 0 : index
    %13 = vector.load %arg6[%c0_10, %c0_11] : memref<1x256xf32, #tpu.memory_space<vmem>>, vector<1x256xf32>
    %14 = vector.broadcast %13 : vector<1x256xf32> to vector<2x256xf32>
    %15 = arith.addf %12, %14 : vector<2x256xf32>
    %cst_12 = arith.constant dense<0.000000e+00> : vector<2xf32>
    %16 = vector.multi_reduction <add>, %15, %cst_12 [1] : vector<2x256xf32> to vector<2xf32>
    %17 = vector.shape_cast %16 : vector<2xf32> to vector<2x1xf32>
    %cst_13 = arith.constant 2.560000e+02 : f32
    %18 = vector.broadcast %cst_13 : f32 to vector<2x1xf32>
    %19 = arith.divf %17, %18 : vector<2x1xf32>
    %20 = vector.broadcast %19 : vector<2x1xf32> to vector<2x256xf32>
    %21 = arith.subf %15, %20 : vector<2x256xf32>
    %22 = arith.mulf %21, %21 : vector<2x256xf32>
    %cst_14 = arith.constant dense<0.000000e+00> : vector<2xf32>
    %23 = vector.multi_reduction <add>, %22, %cst_14 [1] : vector<2x256xf32> to vector<2xf32>
    %24 = vector.shape_cast %23 : vector<2xf32> to vector<2x1xf32>
    %cst_15 = arith.constant 2.560000e+02 : f32
    %25 = vector.broadcast %cst_15 : f32 to vector<2x1xf32>
    %26 = arith.divf %24, %25 : vector<2x1xf32>
    %cst_16 = arith.constant 9.99999974E-6 : f32
    %27 = vector.broadcast %cst_16 : f32 to vector<2x1xf32>
    %28 = arith.addf %26, %27 : vector<2x1xf32>
    %29 = math.rsqrt %28 : vector<2x1xf32>
    %30 = vector.broadcast %29 : vector<2x1xf32> to vector<2x256xf32>
    %31 = arith.mulf %21, %30 : vector<2x256xf32>
    %32 = arith.truncf %31 : vector<2x256xf32> to vector<2x256xbf16>
    %c0_17 = arith.constant 0 : index
    %c0_18 = arith.constant 0 : index
    %33 = vector.load %arg7[%c0_17, %c0_18] : memref<256x128xbf16, #tpu.memory_space<vmem>>, vector<256x128xbf16>
    %cst_19 = arith.constant dense<0.000000e+00> : vector<2x128xf32>
    %34 = tpu.matmul %32, %33, %cst_19 {dimension_numbers = #tpu.dot_dimension_numbers<[1], [0], [0], [1], [0, 0, 1, 1], [], []>} : vector<2x256xbf16>, vector<256x128xbf16>, vector<2x128xf32> -> vector<2x128xf32>
    %c0_20 = arith.constant 0 : index
    %c0_21 = arith.constant 0 : index
    %35 = vector.load %arg8[%c0_20, %c0_21] : memref<1x128xf32, #tpu.memory_space<vmem>>, vector<1x128xf32>
    %36 = vector.broadcast %35 : vector<1x128xf32> to vector<2x128xf32>
    %37 = arith.addf %34, %36 : vector<2x128xf32>
    %cst_22 = arith.constant dense<0xFF800000> : vector<2xf32>
    %38 = vector.multi_reduction <maximumf>, %37, %cst_22 [1] : vector<2x128xf32> to vector<2xf32>
    %39 = vector.shape_cast %38 : vector<2xf32> to vector<2x1xf32>
    %40 = vector.broadcast %39 : vector<2x1xf32> to vector<2x128xf32>
    %41 = arith.subf %37, %40 : vector<2x128xf32>
    %42 = math.exp %41 : vector<2x128xf32>
    %cst_23 = arith.constant dense<0.000000e+00> : vector<2xf32>
    %43 = vector.multi_reduction <add>, %42, %cst_23 [1] : vector<2x128xf32> to vector<2xf32>
    %44 = vector.shape_cast %43 : vector<2xf32> to vector<2x1xf32>
    %45 = tpu.reciprocal %44 : vector<2x1xf32> -> vector<2x1xf32>
    %46 = vector.broadcast %45 : vector<2x1xf32> to vector<2x128xf32>
    %47 = arith.mulf %42, %46 : vector<2x128xf32>
    %48 = arith.truncf %47 : vector<2x128xf32> to vector<2x128xbf16>
    %c0_24 = arith.constant 0 : index
    %c0_25 = arith.constant 0 : index
    %49 = vector.load %arg9[%c0_24, %c0_25] : memref<2x128xbf16, #tpu.memory_space<vmem>>, vector<2x128xbf16>
    tpu.vector_store %arg9[%c0_24, %c0_25], %48 {strides = array<i32>} : memref<2x128xbf16, #tpu.memory_space<vmem>>, vector<2x128xbf16>,
    return
  }
  func.func @transform_0(%arg0: i32) -> (i32, i32) {
    %c0_i32 = arith.constant 0 : i32
    %c0_i32_0 = arith.constant 0 : i32
    return %arg0, %c0_i32 : i32, i32
  }
  func.func @transform_1(%arg0: i32) -> (i32, i32) {
    %c0_i32 = arith.constant 0 : i32
    %c0_i32_0 = arith.constant 0 : i32
    return %arg0, %c0_i32 : i32, i32
  }
  func.func @transform_2(%arg0: i32) -> (i32, i32) {
    %c0_i32 = arith.constant 0 : i32
    %c0_i32_0 = arith.constant 0 : i32
    %c0_i32_1 = arith.constant 0 : i32
    return %c0_i32, %c0_i32_0 : i32, i32
  }
  func.func @transform_3(%arg0: i32) -> (i32, i32) {
    %c0_i32 = arith.constant 0 : i32
    %c0_i32_0 = arith.constant 0 : i32
    %c0_i32_1 = arith.constant 0 : i32
    return %c0_i32, %c0_i32_0 : i32, i32
  }
  func.func @transform_4(%arg0: i32) -> (i32, i32) {
    %c0_i32 = arith.constant 0 : i32
    %c0_i32_0 = arith.constant 0 : i32
    %c0_i32_1 = arith.constant 0 : i32
    return %c0_i32, %c0_i32_0 : i32, i32
  }
  func.func @transform_5(%arg0: i32) -> (i32, i32) {
    %c0_i32 = arith.constant 0 : i32
    %c0_i32_0 = arith.constant 0 : i32
    %c0_i32_1 = arith.constant 0 : i32
    return %c0_i32, %c0_i32_0 : i32, i32
  }
  func.func @transform_6(%arg0: i32) -> (i32, i32) {
    %c0_i32 = arith.constant 0 : i32
    %c0_i32_0 = arith.constant 0 : i32
    %c0_i32_1 = arith.constant 0 : i32
    return %c0_i32, %c0_i32_0 : i32, i32
  }
  func.func @transform_7(%arg0: i32) -> (i32, i32) {
    %c0_i32 = arith.constant 0 : i32
    %c0_i32_0 = arith.constant 0 : i32
    %c0_i32_1 = arith.constant 0 : i32
    return %c0_i32, %c0_i32_0 : i32, i32
  }
  func.func @transform_8(%arg0: i32) -> (i32, i32) {
    %c0_i32 = arith.constant 0 : i32
    %c0_i32_0 = arith.constant 0 : i32
    return %arg0, %c0_i32 : i32, i32
  }
}

</mosaic_0001>

<llo_original>
// kernel: tpu_custom_call.1
$region0: #{tpu_custom_call.1}
  #allocation0 [shape = 'u32[]', space=smem, size = 0x4, offset = 0x4, fixed_abs, tag = 'smem constant byte address 0x4 - core index']
  #allocation1 [shape = 'u32[72,128]{1,0:T(1,128)}', space=vmem, size = 0x9000, scoped, tag = 'internal scratch']
  %s0 = inlined_call_operand.hbm [shape: bf16[2,768], index: 0, kind: input, shape index: {}]
  %s1 = inlined_call_operand.hbm [shape: bf16[2,256], index: 1, kind: input, shape index: {}]
  %s2 = inlined_call_operand.hbm [shape: bf16[768,768], index: 2, kind: input, shape index: {}]
  %s3 = inlined_call_operand.hbm [shape: f32[1,768], index: 3, kind: input, shape index: {}]
  %s4 = inlined_call_operand.hbm [shape: bf16[768,256], index: 4, kind: input, shape index: {}]
  %s5 = inlined_call_operand.hbm [shape: f32[1,256], index: 5, kind: input, shape index: {}]
  %s6 = inlined_call_operand.hbm [shape: bf16[256,128], index: 6, kind: input, shape index: {}]
  %s7 = inlined_call_operand.hbm [shape: f32[1,128], index: 7, kind: input, shape index: {}]
  %s8 = inlined_call_operand.hbm [shape: bf16[2,128], index: 8, kind: output, shape index: {}]
  %s9 = sld [smem:[#allocation0]]
  $region74: #{tpu_custom_call.1} parent=0
    _
  %s11 = ssub.s32 1, %s9
  %s12 = scalar_select 0, %s11, %s9
  $region1: #{tpu_custom_call.1} parent=0
    #allocation2 [shape = 'u8[3072]{0}', space=vmem, size = 0xc00, scoped, tag = 'input window, operand 0, single buffered']
    #allocation3 [shape = 's32[1]{0}', space=sflag, size = 0x4, scoped, tag = 'scoped memory for tpu_custom_call.1']
    #allocation4 [shape = 's32[1]{0}', space=sflag, size = 0x4, scoped, tag = 'scoped memory for tpu_custom_call.1']
    #allocation5 [shape = 'u8[1024]{0}', space=vmem, size = 0x400, scoped, tag = 'input window, operand 1, single buffered']
    #allocation6 [shape = 's32[1]{0}', space=sflag, size = 0x4, scoped, tag = 'scoped memory for tpu_custom_call.1']
    #allocation7 [shape = 'u8[1179648]{0}', space=vmem, size = 0x120000, scoped, tag = 'input window, operand 2, single buffered']
    #allocation8 [shape = 'u8[3072]{0}', space=vmem, size = 0xc00, scoped, tag = 'input window, operand 3, single buffered']
    #allocation9 [shape = 's32[1]{0}', space=sflag, size = 0x4, scoped, tag = 'scoped memory for tpu_custom_call.1']
    #allocation10 [shape = 'u8[393216]{0}', space=vmem, size = 0x60000, scoped, tag = 'input window, operand 4, single buffered']
    #allocation11 [shape = 'u8[1024]{0}', space=vmem, size = 0x400, scoped, tag = 'input window, operand 5, single buffered']
    #allocation12 [shape = 's32[1]{0}', space=sflag, size = 0x4, scoped, tag = 'scoped memory for tpu_custom_call.1']
    #allocation13 [shape = 'u8[65536]{0}', space=vmem, size = 0x10000, scoped, tag = 'input window, operand 6, single buffered']
    #allocation14 [shape = 'u8[512]{0}', space=vmem, size = 0x400, scoped, tag = 'input window, operand 7, single buffered']
    #allocation15 [shape = 's32[1]{0}', space=sflag, size = 0x4, scoped, tag = 'scoped memory for tpu_custom_call.1']
    #allocation16 [shape = 'u8[512]{0}', space=vmem, size = 0x400, scoped, tag = 'output window, operand 0, single buffered']
    %13 = vsyncpa [#allocation3], 0
    %14 = vsyncpa [#allocation6], 0
    %15 = vsyncpa [#allocation9], 0
    %16 = vsyncpa [#allocation12], 0
    %17 = vsyncpa [#allocation15], 0
    %18 = vsyncpa [#allocation4], 0
    // Predicated region
    $region2: #{tpu_custom_call.1} parent=1 // pred_check
      _
    $region3: #{tpu_custom_call.1} parent=1 // pred_check_branch
      %20 = sbr.rel (0) target = $region5
    $region4: #{tpu_custom_call.1} parent=1 // pred_region
      %22 = vsyncadd [#allocation3], 0
      %s24 = sshll.u32 %s0, 4
      %s25 = int_to_ptr.hbm [resolvable:$true] %s24
      %s26 = sshll.u32 [#allocation2], 4
      %s27 = int_to_ptr.vmem [resolvable:$true] %s26
      %29 = dma.hbm_to_vmem [thread:$0]  %s25, 96, %s27, [#allocation3]
    $region5: #{tpu_custom_call.1} parent=1 // pred_fallthru
      _
    // Predicated region
    $region6: #{tpu_custom_call.1} parent=1 // pred_check
      _
    $region7: #{tpu_custom_call.1} parent=1 // pred_check_branch
      %31 = sbr.rel (0) target = $region9
    $region8: #{tpu_custom_call.1} parent=1 // pred_region
      %33 = vsyncadd [#allocation6], 0
      %s35 = sshll.u32 %s1, 4
      %s36 = int_to_ptr.hbm [resolvable:$true] %s35
      %s37 = sshll.u32 [#allocation5], 4
      %s38 = int_to_ptr.vmem [resolvable:$true] %s37
      %40 = dma.hbm_to_vmem [thread:$0]  %s36, 32, %s38, [#allocation6]
    $region9: #{tpu_custom_call.1} parent=1 // pred_fallthru
      _
    // Predicated region
    $region10: #{tpu_custom_call.1} parent=1 // pred_check
      _
    $region11: #{tpu_custom_call.1} parent=1 // pred_check_branch
      %42 = sbr.rel (0) target = $region13
    $region12: #{tpu_custom_call.1} parent=1 // pred_region
      %44 = vsyncadd [#allocation6], 0
      %s45 = sshll.u32 %s2, 4
      %s46 = int_to_ptr.hbm [resolvable:$true] %s45
      %s47 = sshll.u32 [#allocation7], 4
      %s48 = int_to_ptr.vmem [resolvable:$true] %s47
      %53 = dma.hbm_to_vmem [thread:$0]  %s46, 36864, %s48, [#allocation6], 384, 384, 24
    $region13: #{tpu_custom_call.1} parent=1 // pred_fallthru
      _
    // Predicated region
    $region14: #{tpu_custom_call.1} parent=1 // pred_check
      _
    $region15: #{tpu_custom_call.1} parent=1 // pred_check_branch
      %55 = sbr.rel (0) target = $region17
    $region16: #{tpu_custom_call.1} parent=1 // pred_region
      %57 = vsyncadd [#allocation9], 0
      %s59 = sshll.u32 %s3, 4
      %s60 = int_to_ptr.hbm [resolvable:$true] %s59
      %s61 = sshll.u32 [#allocation8], 4
      %s62 = int_to_ptr.vmem [resolvable:$true] %s61
      %64 = dma.hbm_to_vmem [thread:$0]  %s60, 96, %s62, [#allocation9]
    $region17: #{tpu_custom_call.1} parent=1 // pred_fallthru
      _
    // Predicated region
    $region18: #{tpu_custom_call.1} parent=1 // pred_check
      _
    $region19: #{tpu_custom_call.1} parent=1 // pred_check_branch
      %66 = sbr.rel (0) target = $region21
    $region20: #{tpu_custom_call.1} parent=1 // pred_region
      %68 = vsyncadd [#allocation9], 0
      %s69 = sshll.u32 %s4, 4
      %s70 = int_to_ptr.hbm [resolvable:$true] %s69
      %s71 = sshll.u32 [#allocation10], 4
      %s72 = int_to_ptr.vmem [resolvable:$true] %s71
      %77 = dma.hbm_to_vmem [thread:$0]  %s70, 12288, %s72, [#allocation9], 128, 128, 8
    $region21: #{tpu_custom_call.1} parent=1 // pred_fallthru
      _
    // Predicated region
    $region22: #{tpu_custom_call.1} parent=1 // pred_check
      _
    $region23: #{tpu_custom_call.1} parent=1 // pred_check_branch
      %79 = sbr.rel (0) target = $region25
    $region24: #{tpu_custom_call.1} parent=1 // pred_region
      %81 = vsyncadd [#allocation12], 0
      %s83 = sshll.u32 %s5, 4
      %s84 = int_to_ptr.hbm [resolvable:$true] %s83
      %s85 = sshll.u32 [#allocation11], 4
      %s86 = int_to_ptr.vmem [resolvable:$true] %s85
      %88 = dma.hbm_to_vmem [thread:$0]  %s84, 32, %s86, [#allocation12]
    $region25: #{tpu_custom_call.1} parent=1 // pred_fallthru
      _
    // Predicated region
    $region26: #{tpu_custom_call.1} parent=1 // pred_check
      _
    $region27: #{tpu_custom_call.1} parent=1 // pred_check_branch
      %90 = sbr.rel (0) target = $region29
    $region28: #{tpu_custom_call.1} parent=1 // pred_region
      %92 = vsyncadd [#allocation12], 0
      %s93 = sshll.u32 %s6, 4
      %s94 = int_to_ptr.hbm [resolvable:$true] %s93
      %s95 = sshll.u32 [#allocation13], 4
      %s96 = int_to_ptr.vmem [resolvable:$true] %s95
      %101 = dma.hbm_to_vmem [thread:$0]  %s94, 2048, %s96, [#allocation12], 64, 64, 4
    $region29: #{tpu_custom_call.1} parent=1 // pred_fallthru
      _
    // Predicated region
    $region30: #{tpu_custom_call.1} parent=1 // pred_check
      _
    $region31: #{tpu_custom_call.1} parent=1 // pred_check_branch
      %103 = sbr.rel (0) target = $region33
    $region32: #{tpu_custom_call.1} parent=1 // pred_region
      %105 = vsyncadd [#allocation15], 0
      %s107 = sshll.u32 %s7, 4
      %s108 = int_to_ptr.hbm [resolvable:$true] %s107
      %s109 = sshll.u32 [#allocation14], 4
      %s110 = int_to_ptr.vmem [resolvable:$true] %s109
      %112 = dma.hbm_to_vmem [thread:$0]  %s108, 16, %s110, [#allocation15]
    $region33: #{tpu_custom_call.1} parent=1 // pred_fallthru
      _
    // Predicated region
    $region34: #{tpu_custom_call.1} parent=1 // pred_check
      _
    $region35: #{tpu_custom_call.1} parent=1 // pred_check_branch
      %114 = sbr.rel (0) target = $region37
    $region36: #{tpu_custom_call.1} parent=1 // pred_region
      %116 = dma.done [#allocation3], 96
    $region37: #{tpu_custom_call.1} parent=1 // pred_fallthru
      _
    // Predicated region
    $region38: #{tpu_custom_call.1} parent=1 // pred_check
      _
    $region39: #{tpu_custom_call.1} parent=1 // pred_check_branch
      %118 = sbr.rel (0) target = $region41
    $region40: #{tpu_custom_call.1} parent=1 // pred_region
      %120 = dma.done [#allocation6], 32
    $region41: #{tpu_custom_call.1} parent=1 // pred_fallthru
      _
    // Predicated region
    $region42: #{tpu_custom_call.1} parent=1 // pred_check
      _
    $region43: #{tpu_custom_call.1} parent=1 // pred_check_branch
      %122 = sbr.rel (0) target = $region45
    $region44: #{tpu_custom_call.1} parent=1 // pred_region
      %124 = dma.done [#allocation6], 36864
    $region45: #{tpu_custom_call.1} parent=1 // pred_fallthru
      _
    // Predicated region
    $region46: #{tpu_custom_call.1} parent=1 // pred_check
      _
    $region47: #{tpu_custom_call.1} parent=1 // pred_check_branch
      %126 = sbr.rel (0) target = $region49
    $region48: #{tpu_custom_call.1} parent=1 // pred_region
      %128 = dma.done [#allocation9], 96
    $region49: #{tpu_custom_call.1} parent=1 // pred_fallthru
      _
    // Predicated region
    $region50: #{tpu_custom_call.1} parent=1 // pred_check
      _
    $region51: #{tpu_custom_call.1} parent=1 // pred_check_branch
      %130 = sbr.rel (0) target = $region53
    $region52: #{tpu_custom_call.1} parent=1 // pred_region
      %132 = dma.done [#allocation9], 12288
    $region53: #{tpu_custom_call.1} parent=1 // pred_fallthru
      _
    // Predicated region
    $region54: #{tpu_custom_call.1} parent=1 // pred_check
      _
    $region55: #{tpu_custom_call.1} parent=1 // pred_check_branch
      %134 = sbr.rel (0) target = $region57
    $region56: #{tpu_custom_call.1} parent=1 // pred_region
      %136 = dma.done [#allocation12], 32
    $region57: #{tpu_custom_call.1} parent=1 // pred_fallthru
      _
    // Predicated region
    $region58: #{tpu_custom_call.1} parent=1 // pred_check
      _
    $region59: #{tpu_custom_call.1} parent=1 // pred_check_branch
      %138 = sbr.rel (0) target = $region61
    $region60: #{tpu_custom_call.1} parent=1 // pred_region
      %140 = dma.done [#allocation12], 2048
    $region61: #{tpu_custom_call.1} parent=1 // pred_fallthru
      _
    // Predicated region
    $region62: #{tpu_custom_call.1} parent=1 // pred_check
      _
    $region63: #{tpu_custom_call.1} parent=1 // pred_check_branch
      %142 = sbr.rel (0) target = $region65
    $region64: #{tpu_custom_call.1} parent=1 // pred_region
      %144 = dma.done [#allocation15], 16
    $region65: #{tpu_custom_call.1} parent=1 // pred_fallthru
      _
    %v145 = vld [vmem:[#allocation2] sm:$0x3f]
    %v146 = vld [vmem:[#allocation7] sm:$0xff]
    %v147 = vld [vmem:[#allocation7 + $0x8] sm:$0xff]
    %v148 = vld [vmem:[#allocation7 + $0x10] sm:$0xff]
    %v149 = vld [vmem:[#allocation7 + $0x18] sm:$0xff]
    %v150 = vld [vmem:[#allocation7 + $0x20] sm:$0xff]
    %v151 = vld [vmem:[#allocation7 + $0x28] sm:$0xff]
    %v152 = vld [vmem:[#allocation7 + $0x30] sm:$0xff]
    %v153 = vld [vmem:[#allocation7 + $0x38] sm:$0xff]
    %v154 = vld [vmem:[#allocation7 + $0x40] sm:$0xff]
    %v155 = vld [vmem:[#allocation7 + $0x48] sm:$0xff]
    %v156 = vld [vmem:[#allocation7 + $0x50] sm:$0xff]
    %v157 = vld [vmem:[#allocation7 + $0x58] sm:$0xff]
    %v158 = vld [vmem:[#allocation7 + $0x60] sm:$0xff]
    %v159 = vld [vmem:[#allocation7 + $0x68] sm:$0xff]
    %v160 = vld [vmem:[#allocation7 + $0x70] sm:$0xff]
    %v161 = vld [vmem:[#allocation7 + $0x78] sm:$0xff]
    %v162 = vld [vmem:[#allocation7 + $0x80] sm:$0xff]
    %v163 = vld [vmem:[#allocation7 + $0x88] sm:$0xff]
    %v164 = vld [vmem:[#allocation7 + $0x90] sm:$0xff]
    %v165 = vld [vmem:[#allocation7 + $0x98] sm:$0xff]
    %v166 = vld [vmem:[#allocation7 + $0xa0] sm:$0xff]
    %v167 = vld [vmem:[#allocation7 + $0xa8] sm:$0xff]
    %v168 = vld [vmem:[#allocation7 + $0xb0] sm:$0xff]
    %v169 = vld [vmem:[#allocation7 + $0xb8] sm:$0xff]
    %v170 = vld [vmem:[#allocation7 + $0xc0] sm:$0xff]
    %v171 = vld [vmem:[#allocation7 + $0xc8] sm:$0xff]
    %v172 = vld [vmem:[#allocation7 + $0xd0] sm:$0xff]
    %v173 = vld [vmem:[#allocation7 + $0xd8] sm:$0xff]
    %v174 = vld [vmem:[#allocation7 + $0xe0] sm:$0xff]
    %v175 = vld [vmem:[#allocation7 + $0xe8] sm:$0xff]
    %v176 = vld [vmem:[#allocation7 + $0xf0] sm:$0xff]
    %v177 = vld [vmem:[#allocation7 + $0xf8] sm:$0xff]
    %v178 = vld [vmem:[#allocation7 + $0x100] sm:$0xff]
    %v179 = vld [vmem:[#allocation7 + $0x108] sm:$0xff]
    %v180 = vld [vmem:[#allocation7 + $0x110] sm:$0xff]
    %v181 = vld [vmem:[#allocation7 + $0x118] sm:$0xff]
    %v182 = vld [vmem:[#allocation7 + $0x120] sm:$0xff]
    %v183 = vld [vmem:[#allocation7 + $0x128] sm:$0xff]
    %v184 = vld [vmem:[#allocation7 + $0x130] sm:$0xff]
    %v185 = vld [vmem:[#allocation7 + $0x138] sm:$0xff]
    %v186 = vld [vmem:[#allocation7 + $0x140] sm:$0xff]
    %v187 = vld [vmem:[#allocation7 + $0x148] sm:$0xff]
    %v188 = vld [vmem:[#allocation7 + $0x150] sm:$0xff]
    %v189 = vld [vmem:[#allocation7 + $0x158] sm:$0xff]
    %v190 = vld [vmem:[#allocation7 + $0x160] sm:$0xff]
    %v191 = vld [vmem:[#allocation7 + $0x168] sm:$0xff]
    %v192 = vld [vmem:[#allocation7 + $0x170] sm:$0xff]
    %v193 = vld [vmem:[#allocation7 + $0x178] sm:$0xff]
    %v194 = vld [vmem:[#allocation7 + $0x180] sm:$0xff]
    %v195 = vld [vmem:[#allocation7 + $0x188] sm:$0xff]
    %v196 = vld [vmem:[#allocation7 + $0x190] sm:$0xff]
    %v197 = vld [vmem:[#allocation7 + $0x198] sm:$0xff]
    %v198 = vld [vmem:[#allocation7 + $0x1a0] sm:$0xff]
    %v199 = vld [vmem:[#allocation7 + $0x1a8] sm:$0xff]
    %v200 = vld [vmem:[#allocation7 + $0x1b0] sm:$0xff]
    %v201 = vld [vmem:[#allocation7 + $0x1b8] sm:$0xff]
    %v202 = vld [vmem:[#allocation7 + $0x1c0] sm:$0xff]
    %v203 = vld [vmem:[#allocation7 + $0x1c8] sm:$0xff]
    %v204 = vld [vmem:[#allocation7 + $0x1d0] sm:$0xff]
    %v205 = vld [vmem:[#allocation7 + $0x1d8] sm:$0xff]
    %v206 = vld [vmem:[#allocation7 + $0x1e0] sm:$0xff]
    %v207 = vld [vmem:[#allocation7 + $0x1e8] sm:$0xff]
    %v208 = vld [vmem:[#allocation7 + $0x1f0] sm:$0xff]
    %v209 = vld [vmem:[#allocation7 + $0x1f8] sm:$0xff]
    %v210 = vld [vmem:[#allocation7 + $0x200] sm:$0xff]
    %v211 = vld [vmem:[#allocation7 + $0x208] sm:$0xff]
    %v212 = vld [vmem:[#allocation7 + $0x210] sm:$0xff]
    %v213 = vld [vmem:[#allocation7 + $0x218] sm:$0xff]
    %v214 = vld [vmem:[#allocation7 + $0x220] sm:$0xff]
    %v215 = vld [vmem:[#allocation7 + $0x228] sm:$0xff]
    %v216 = vld [vmem:[#allocation7 + $0x230] sm:$0xff]
    %v217 = vld [vmem:[#allocation7 + $0x238] sm:$0xff]
    %v218 = vld [vmem:[#allocation7 + $0x240] sm:$0xff]
    %v219 = vld [vmem:[#allocation7 + $0x248] sm:$0xff]
    %v220 = vld [vmem:[#allocation7 + $0x250] sm:$0xff]
    %v221 = vld [vmem:[#allocation7 + $0x258] sm:$0xff]
    %v222 = vld [vmem:[#allocation7 + $0x260] sm:$0xff]
    %v223 = vld [vmem:[#allocation7 + $0x268] sm:$0xff]
    %v224 = vld [vmem:[#allocation7 + $0x270] sm:$0xff]
    %v225 = vld [vmem:[#allocation7 + $0x278] sm:$0xff]
    %v226 = vld [vmem:[#allocation7 + $0x280] sm:$0xff]
    %v227 = vld [vmem:[#allocation7 + $0x288] sm:$0xff]
    %v228 = vld [vmem:[#allocation7 + $0x290] sm:$0xff]
    %v229 = vld [vmem:[#allocation7 + $0x298] sm:$0xff]
    %v230 = vld [vmem:[#allocation7 + $0x2a0] sm:$0xff]
    %v231 = vld [vmem:[#allocation7 + $0x2a8] sm:$0xff]
    %v232 = vld [vmem:[#allocation7 + $0x2b0] sm:$0xff]
    %v233 = vld [vmem:[#allocation7 + $0x2b8] sm:$0xff]
    %v234 = vld [vmem:[#allocation7 + $0x2c0] sm:$0xff]
    %v235 = vld [vmem:[#allocation7 + $0x2c8] sm:$0xff]
    %v236 = vld [vmem:[#allocation7 + $0x2d0] sm:$0xff]
    %v237 = vld [vmem:[#allocation7 + $0x2d8] sm:$0xff]
    %v238 = vld [vmem:[#allocation7 + $0x2e0] sm:$0xff]
    %v239 = vld [vmem:[#allocation7 + $0x2e8] sm:$0xff]
    %v240 = vld [vmem:[#allocation7 + $0x2f0] sm:$0xff]
    %v241 = vld [vmem:[#allocation7 + $0x2f8] sm:$0xff]
    %v242 = vld [vmem:[#allocation7 + $0x300] sm:$0xff]
    %v243 = vld [vmem:[#allocation7 + $0x308] sm:$0xff]
    %v244 = vld [vmem:[#allocation7 + $0x310] sm:$0xff]
    %v245 = vld [vmem:[#allocation7 + $0x318] sm:$0xff]
    %v246 = vld [vmem:[#allocation7 + $0x320] sm:$0xff]
    %v247 = vld [vmem:[#allocation7 + $0x328] sm:$0xff]
    %v248 = vld [vmem:[#allocation7 + $0x330] sm:$0xff]
    %v249 = vld [vmem:[#allocation7 + $0x338] sm:$0xff]
    %v250 = vld [vmem:[#allocation7 + $0x340] sm:$0xff]
    %v251 = vld [vmem:[#allocation7 + $0x348] sm:$0xff]
    %v252 = vld [vmem:[#allocation7 + $0x350] sm:$0xff]
    %v253 = vld [vmem:[#allocation7 + $0x358] sm:$0xff]
    %v254 = vld [vmem:[#allocation7 + $0x360] sm:$0xff]
    %v255 = vld [vmem:[#allocation7 + $0x368] sm:$0xff]
    %v256 = vld [vmem:[#allocation7 + $0x370] sm:$0xff]
    %v257 = vld [vmem:[#allocation7 + $0x378] sm:$0xff]
    %v258 = vld [vmem:[#allocation7 + $0x380] sm:$0xff]
    %v259 = vld [vmem:[#allocation7 + $0x388] sm:$0xff]
    %v260 = vld [vmem:[#allocation7 + $0x390] sm:$0xff]
    %v261 = vld [vmem:[#allocation7 + $0x398] sm:$0xff]
    %v262 = vld [vmem:[#allocation7 + $0x3a0] sm:$0xff]
    %v263 = vld [vmem:[#allocation7 + $0x3a8] sm:$0xff]
    %v264 = vld [vmem:[#allocation7 + $0x3b0] sm:$0xff]
    %v265 = vld [vmem:[#allocation7 + $0x3b8] sm:$0xff]
    %v266 = vld [vmem:[#allocation7 + $0x3c0] sm:$0xff]
    %v267 = vld [vmem:[#allocation7 + $0x3c8] sm:$0xff]
    %v268 = vld [vmem:[#allocation7 + $0x3d0] sm:$0xff]
    %v269 = vld [vmem:[#allocation7 + $0x3d8] sm:$0xff]
    %v270 = vld [vmem:[#allocation7 + $0x3e0] sm:$0xff]
    %v271 = vld [vmem:[#allocation7 + $0x3e8] sm:$0xff]
    %v272 = vld [vmem:[#allocation7 + $0x3f0] sm:$0xff]
    %v273 = vld [vmem:[#allocation7 + $0x3f8] sm:$0xff]
    %v274 = vld [vmem:[#allocation7 + $0x400] sm:$0xff]
    %v275 = vld [vmem:[#allocation7 + $0x408] sm:$0xff]
    %v276 = vld [vmem:[#allocation7 + $0x410] sm:$0xff]
    %v277 = vld [vmem:[#allocation7 + $0x418] sm:$0xff]
    %v278 = vld [vmem:[#allocation7 + $0x420] sm:$0xff]
    %v279 = vld [vmem:[#allocation7 + $0x428] sm:$0xff]
    %v280 = vld [vmem:[#allocation7 + $0x430] sm:$0xff]
    %v281 = vld [vmem:[#allocation7 + $0x438] sm:$0xff]
    %v282 = vld [vmem:[#allocation7 + $0x440] sm:$0xff]
    %v283 = vld [vmem:[#allocation7 + $0x448] sm:$0xff]
    %v284 = vld [vmem:[#allocation7 + $0x450] sm:$0xff]
    %v285 = vld [vmem:[#allocation7 + $0x458] sm:$0xff]
    %v286 = vld [vmem:[#allocation7 + $0x460] sm:$0xff]
    %v287 = vld [vmem:[#allocation7 + $0x468] sm:$0xff]
    %v288 = vld [vmem:[#allocation7 + $0x470] sm:$0xff]
    %v289 = vld [vmem:[#allocation7 + $0x478] sm:$0xff]
    %v290 = vld [vmem:[#allocation7 + $0x480] sm:$0xff]
    %v291 = vld [vmem:[#allocation7 + $0x488] sm:$0xff]
    %v292 = vld [vmem:[#allocation7 + $0x490] sm:$0xff]
    %v293 = vld [vmem:[#allocation7 + $0x498] sm:$0xff]
    %v294 = vld [vmem:[#allocation7 + $0x4a0] sm:$0xff]
    %v295 = vld [vmem:[#allocation7 + $0x4a8] sm:$0xff]
    %v296 = vld [vmem:[#allocation7 + $0x4b0] sm:$0xff]
    %v297 = vld [vmem:[#allocation7 + $0x4b8] sm:$0xff]
    %v298 = vld [vmem:[#allocation7 + $0x4c0] sm:$0xff]
    %v299 = vld [vmem:[#allocation7 + $0x4c8] sm:$0xff]
    %v300 = vld [vmem:[#allocation7 + $0x4d0] sm:$0xff]
    %v301 = vld [vmem:[#allocation7 + $0x4d8] sm:$0xff]
    %v302 = vld [vmem:[#allocation7 + $0x4e0] sm:$0xff]
    %v303 = vld [vmem:[#allocation7 + $0x4e8] sm:$0xff]
    %v304 = vld [vmem:[#allocation7 + $0x4f0] sm:$0xff]
    %v305 = vld [vmem:[#allocation7 + $0x4f8] sm:$0xff]
    %v306 = vld [vmem:[#allocation7 + $0x500] sm:$0xff]
    %v307 = vld [vmem:[#allocation7 + $0x508] sm:$0xff]
    %v308 = vld [vmem:[#allocation7 + $0x510] sm:$0xff]
    %v309 = vld [vmem:[#allocation7 + $0x518] sm:$0xff]
    %v310 = vld [vmem:[#allocation7 + $0x520] sm:$0xff]
    %v311 = vld [vmem:[#allocation7 + $0x528] sm:$0xff]
    %v312 = vld [vmem:[#allocation7 + $0x530] sm:$0xff]
    %v313 = vld [vmem:[#allocation7 + $0x538] sm:$0xff]
    %v314 = vld [vmem:[#allocation7 + $0x540] sm:$0xff]
    %v315 = vld [vmem:[#allocation7 + $0x548] sm:$0xff]
    %v316 = vld [vmem:[#allocation7 + $0x550] sm:$0xff]
    %v317 = vld [vmem:[#allocation7 + $0x558] sm:$0xff]
    %v318 = vld [vmem:[#allocation7 + $0x560] sm:$0xff]
    %v319 = vld [vmem:[#allocation7 + $0x568] sm:$0xff]
    %v320 = vld [vmem:[#allocation7 + $0x570] sm:$0xff]
    %v321 = vld [vmem:[#allocation7 + $0x578] sm:$0xff]
    %v322 = vld [vmem:[#allocation7 + $0x580] sm:$0xff]
    %v323 = vld [vmem:[#allocation7 + $0x588] sm:$0xff]
    %v324 = vld [vmem:[#allocation7 + $0x590] sm:$0xff]
    %v325 = vld [vmem:[#allocation7 + $0x598] sm:$0xff]
    %v326 = vld [vmem:[#allocation7 + $0x5a0] sm:$0xff]
    %v327 = vld [vmem:[#allocation7 + $0x5a8] sm:$0xff]
    %v328 = vld [vmem:[#allocation7 + $0x5b0] sm:$0xff]
    %v329 = vld [vmem:[#allocation7 + $0x5b8] sm:$0xff]
    %v330 = vld [vmem:[#allocation7 + $0x5c0] sm:$0xff]
    %v331 = vld [vmem:[#allocation7 + $0x5c8] sm:$0xff]
    %v332 = vld [vmem:[#allocation7 + $0x5d0] sm:$0xff]
    %v333 = vld [vmem:[#allocation7 + $0x5d8] sm:$0xff]
    %v334 = vld [vmem:[#allocation7 + $0x5e0] sm:$0xff]
    %v335 = vld [vmem:[#allocation7 + $0x5e8] sm:$0xff]
    %v336 = vld [vmem:[#allocation7 + $0x5f0] sm:$0xff]
    %v337 = vld [vmem:[#allocation7 + $0x5f8] sm:$0xff]
    %v338 = vld [vmem:[#allocation7 + $0x600] sm:$0xff]
    %v339 = vld [vmem:[#allocation7 + $0x608] sm:$0xff]
    %v340 = vld [vmem:[#allocation7 + $0x610] sm:$0xff]
    %v341 = vld [vmem:[#allocation7 + $0x618] sm:$0xff]
    %v342 = vld [vmem:[#allocation7 + $0x620] sm:$0xff]
    %v343 = vld [vmem:[#allocation7 + $0x628] sm:$0xff]
    %v344 = vld [vmem:[#allocation7 + $0x630] sm:$0xff]
    %v345 = vld [vmem:[#allocation7 + $0x638] sm:$0xff]
    %v346 = vld [vmem:[#allocation7 + $0x640] sm:$0xff]
    %v347 = vld [vmem:[#allocation7 + $0x648] sm:$0xff]
    %v348 = vld [vmem:[#allocation7 + $0x650] sm:$0xff]
    %v349 = vld [vmem:[#allocation7 + $0x658] sm:$0xff]
    %v350 = vld [vmem:[#allocation7 + $0x660] sm:$0xff]
    %v351 = vld [vmem:[#allocation7 + $0x668] sm:$0xff]
    %v352 = vld [vmem:[#allocation7 + $0x670] sm:$0xff]
    %v353 = vld [vmem:[#allocation7 + $0x678] sm:$0xff]
    %v354 = vld [vmem:[#allocation7 + $0x680] sm:$0xff]
    %v355 = vld [vmem:[#allocation7 + $0x688] sm:$0xff]
    %v356 = vld [vmem:[#allocation7 + $0x690] sm:$0xff]
    %v357 = vld [vmem:[#allocation7 + $0x698] sm:$0xff]
    %v358 = vld [vmem:[#allocation7 + $0x6a0] sm:$0xff]
    %v359 = vld [vmem:[#allocation7 + $0x6a8] sm:$0xff]
    %v360 = vld [vmem:[#allocation7 + $0x6b0] sm:$0xff]
    %v361 = vld [vmem:[#allocation7 + $0x6b8] sm:$0xff]
    %v362 = vld [vmem:[#allocation7 + $0x6c0] sm:$0xff]
    %v363 = vld [vmem:[#allocation7 + $0x6c8] sm:$0xff]
    %v364 = vld [vmem:[#allocation7 + $0x6d0] sm:$0xff]
    %v365 = vld [vmem:[#allocation7 + $0x6d8] sm:$0xff]
    %v366 = vld [vmem:[#allocation7 + $0x6e0] sm:$0xff]
    %v367 = vld [vmem:[#allocation7 + $0x6e8] sm:$0xff]
    %v368 = vld [vmem:[#allocation7 + $0x6f0] sm:$0xff]
    %v369 = vld [vmem:[#allocation7 + $0x6f8] sm:$0xff]
    %v370 = vld [vmem:[#allocation7 + $0x700] sm:$0xff]
    %v371 = vld [vmem:[#allocation7 + $0x708] sm:$0xff]
    %v372 = vld [vmem:[#allocation7 + $0x710] sm:$0xff]
    %v373 = vld [vmem:[#allocation7 + $0x718] sm:$0xff]
    %v374 = vld [vmem:[#allocation7 + $0x720] sm:$0xff]
    %v375 = vld [vmem:[#allocation7 + $0x728] sm:$0xff]
    %v376 = vld [vmem:[#allocation7 + $0x730] sm:$0xff]
    %v377 = vld [vmem:[#allocation7 + $0x738] sm:$0xff]
    %v378 = vld [vmem:[#allocation7 + $0x740] sm:$0xff]
    %v379 = vld [vmem:[#allocation7 + $0x748] sm:$0xff]
    %v380 = vld [vmem:[#allocation7 + $0x750] sm:$0xff]
    %v381 = vld [vmem:[#allocation7 + $0x758] sm:$0xff]
    %v382 = vld [vmem:[#allocation7 + $0x760] sm:$0xff]
    %v383 = vld [vmem:[#allocation7 + $0x768] sm:$0xff]
    %v384 = vld [vmem:[#allocation7 + $0x770] sm:$0xff]
    %v385 = vld [vmem:[#allocation7 + $0x778] sm:$0xff]
    %v386 = vld [vmem:[#allocation7 + $0x780] sm:$0xff]
    %v387 = vld [vmem:[#allocation7 + $0x788] sm:$0xff]
    %v388 = vld [vmem:[#allocation7 + $0x790] sm:$0xff]
    %v389 = vld [vmem:[#allocation7 + $0x798] sm:$0xff]
    %v390 = vld [vmem:[#allocation7 + $0x7a0] sm:$0xff]
    %v391 = vld [vmem:[#allocation7 + $0x7a8] sm:$0xff]
    %v392 = vld [vmem:[#allocation7 + $0x7b0] sm:$0xff]
    %v393 = vld [vmem:[#allocation7 + $0x7b8] sm:$0xff]
    %v394 = vld [vmem:[#allocation7 + $0x7c0] sm:$0xff]
    %v395 = vld [vmem:[#allocation7 + $0x7c8] sm:$0xff]
    %v396 = vld [vmem:[#allocation7 + $0x7d0] sm:$0xff]
    %v397 = vld [vmem:[#allocation7 + $0x7d8] sm:$0xff]
    %v398 = vld [vmem:[#allocation7 + $0x7e0] sm:$0xff]
    %v399 = vld [vmem:[#allocation7 + $0x7e8] sm:$0xff]
    %v400 = vld [vmem:[#allocation7 + $0x7f0] sm:$0xff]
    %v401 = vld [vmem:[#allocation7 + $0x7f8] sm:$0xff]
    %v402 = vld [vmem:[#allocation7 + $0x800] sm:$0xff]
    %v403 = vld [vmem:[#allocation7 + $0x808] sm:$0xff]
    %v404 = vld [vmem:[#allocation7 + $0x810] sm:$0xff]
    %v405 = vld [vmem:[#allocation7 + $0x818] sm:$0xff]
    %v406 = vld [vmem:[#allocation7 + $0x820] sm:$0xff]
    %v407 = vld [vmem:[#allocation7 + $0x828] sm:$0xff]
    %v408 = vld [vmem:[#allocation7 + $0x830] sm:$0xff]
    %v409 = vld [vmem:[#allocation7 + $0x838] sm:$0xff]
    %v410 = vld [vmem:[#allocation7 + $0x840] sm:$0xff]
    %v411 = vld [vmem:[#allocation7 + $0x848] sm:$0xff]
    %v412 = vld [vmem:[#allocation7 + $0x850] sm:$0xff]
    %v413 = vld [vmem:[#allocation7 + $0x858] sm:$0xff]
    %v414 = vld [vmem:[#allocation7 + $0x860] sm:$0xff]
    %v415 = vld [vmem:[#allocation7 + $0x868] sm:$0xff]
    %v416 = vld [vmem:[#allocation7 + $0x870] sm:$0xff]
    %v417 = vld [vmem:[#allocation7 + $0x878] sm:$0xff]
    %v418 = vld [vmem:[#allocation7 + $0x880] sm:$0xff]
    %v419 = vld [vmem:[#allocation7 + $0x888] sm:$0xff]
    %v420 = vld [vmem:[#allocation7 + $0x890] sm:$0xff]
    %v421 = vld [vmem:[#allocation7 + $0x898] sm:$0xff]
    %v422 = vld [vmem:[#allocation7 + $0x8a0] sm:$0xff]
    %v423 = vld [vmem:[#allocation7 + $0x8a8] sm:$0xff]
    %v424 = vld [vmem:[#allocation7 + $0x8b0] sm:$0xff]
    %v425 = vld [vmem:[#allocation7 + $0x8b8] sm:$0xff]
    %v426 = vld [vmem:[#allocation7 + $0x8c0] sm:$0xff]
    %v427 = vld [vmem:[#allocation7 + $0x8c8] sm:$0xff]
    %v428 = vld [vmem:[#allocation7 + $0x8d0] sm:$0xff]
    %v429 = vld [vmem:[#allocation7 + $0x8d8] sm:$0xff]
    %v430 = vld [vmem:[#allocation7 + $0x8e0] sm:$0xff]
    %v431 = vld [vmem:[#allocation7 + $0x8e8] sm:$0xff]
    %v432 = vld [vmem:[#allocation7 + $0x8f0] sm:$0xff]
    %v433 = vld [vmem:[#allocation7 + $0x8f8] sm:$0xff]
    %v434 = vld [vmem:[#allocation8] sm:$0x3f]
    %v436 = vperm.slane %v434, 0
    %v437 = vperm.slane %v434, 1
    %v438 = vperm.slane %v434, 2
    %v439 = vperm.slane %v434, 3
    %v440 = vperm.slane %v434, 4
    %v441 = vperm.slane %v434, 5
    %449 = vst [vmem:[#allocation1] ss:$9 sm:$0xff] %v145
    %v450 = vld [vmem:[#allocation1] sm:$0xff]
    %v451 = vld [vmem:[#allocation1 + $0x9] sm:$0xff]
    %v452 = vld [vmem:[#allocation1 + $0x12] sm:$0xff]
    %v453 = vld [vmem:[#allocation1 + $0x1b] sm:$0xff]
    %v454 = vld [vmem:[#allocation1 + $0x24] sm:$0xff]
    %v455 = vld [vmem:[#allocation1 + $0x2d] sm:$0xff]
    %v750 = vunpack.c.l.b16 %v146
    %v751 = vunpack.c.h.b16 %v146
    %v752 = vunpack.c.l.b16 %v147
    %v753 = vunpack.c.h.b16 %v147
    %v754 = vunpack.c.l.b16 %v148
    %v755 = vunpack.c.h.b16 %v148
    %v756 = vunpack.c.l.b16 %v149
    %v757 = vunpack.c.h.b16 %v149
    %v758 = vunpack.c.l.b16 %v150
    %v759 = vunpack.c.h.b16 %v150
    %v760 = vunpack.c.l.b16 %v151
    %v761 = vunpack.c.h.b16 %v151
    %v762 = vunpack.c.l.b16 %v152
    %v763 = vunpack.c.h.b16 %v152
    %v764 = vunpack.c.l.b16 %v153
    %v765 = vunpack.c.h.b16 %v153
    %v766 = vunpack.c.l.b16 %v154
    %v767 = vunpack.c.h.b16 %v154
    %v768 = vunpack.c.l.b16 %v155
    %v769 = vunpack.c.h.b16 %v155
    %v770 = vunpack.c.l.b16 %v156
    %v771 = vunpack.c.h.b16 %v156
    %v772 = vunpack.c.l.b16 %v157
    %v773 = vunpack.c.h.b16 %v157
    %v774 = vunpack.c.l.b16 %v158
    %v775 = vunpack.c.h.b16 %v158
    %v776 = vunpack.c.l.b16 %v159
    %v777 = vunpack.c.h.b16 %v159
    %v778 = vunpack.c.l.b16 %v160
    %v779 = vunpack.c.h.b16 %v160
    %v780 = vunpack.c.l.b16 %v161
    %v781 = vunpack.c.h.b16 %v161
    %v782 = vunpack.c.l.b16 %v162
    %v783 = vunpack.c.h.b16 %v162
    %v784 = vunpack.c.l.b16 %v163
    %v785 = vunpack.c.h.b16 %v163
    %v786 = vunpack.c.l.b16 %v164
    %v787 = vunpack.c.h.b16 %v164
    %v788 = vunpack.c.l.b16 %v165
    %v789 = vunpack.c.h.b16 %v165
    %v790 = vunpack.c.l.b16 %v166
    %v791 = vunpack.c.h.b16 %v166
    %v792 = vunpack.c.l.b16 %v167
    %v793 = vunpack.c.h.b16 %v167
    %v794 = vunpack.c.l.b16 %v168
    %v795 = vunpack.c.h.b16 %v168
    %v796 = vunpack.c.l.b16 %v169
    %v797 = vunpack.c.h.b16 %v169
    %v798 = vunpack.c.l.b16 %v170
    %v799 = vunpack.c.h.b16 %v170
    %v800 = vunpack.c.l.b16 %v171
    %v801 = vunpack.c.h.b16 %v171
    %v802 = vunpack.c.l.b16 %v172
    %v803 = vunpack.c.h.b16 %v172
    %v804 = vunpack.c.l.b16 %v173
    %v805 = vunpack.c.h.b16 %v173
    %v806 = vunpack.c.l.b16 %v174
    %v807 = vunpack.c.h.b16 %v174
    %v808 = vunpack.c.l.b16 %v175
    %v809 = vunpack.c.h.b16 %v175
    %v810 = vunpack.c.l.b16 %v176
    %v811 = vunpack.c.h.b16 %v176
    %v812 = vunpack.c.l.b16 %v177
    %v813 = vunpack.c.h.b16 %v177
    %v814 = vunpack.c.l.b16 %v178
    %v815 = vunpack.c.h.b16 %v178
    %v816 = vunpack.c.l.b16 %v179
    %v817 = vunpack.c.h.b16 %v179
    %v818 = vunpack.c.l.b16 %v180
    %v819 = vunpack.c.h.b16 %v180
    %v820 = vunpack.c.l.b16 %v181
    %v821 = vunpack.c.h.b16 %v181
    %v822 = vunpack.c.l.b16 %v182
    %v823 = vunpack.c.h.b16 %v182
    %v824 = vunpack.c.l.b16 %v183
    %v825 = vunpack.c.h.b16 %v183
    %v826 = vunpack.c.l.b16 %v184
    %v827 = vunpack.c.h.b16 %v184
    %v828 = vunpack.c.l.b16 %v185
    %v829 = vunpack.c.h.b16 %v185
    %v830 = vunpack.c.l.b16 %v186
    %v831 = vunpack.c.h.b16 %v186
    %v832 = vunpack.c.l.b16 %v187
    %v833 = vunpack.c.h.b16 %v187
    %v834 = vunpack.c.l.b16 %v188
    %v835 = vunpack.c.h.b16 %v188
    %v836 = vunpack.c.l.b16 %v189
    %v837 = vunpack.c.h.b16 %v189
    %v838 = vunpack.c.l.b16 %v190
    %v839 = vunpack.c.h.b16 %v190
    %v840 = vunpack.c.l.b16 %v191
    %v841 = vunpack.c.h.b16 %v191
    %v842 = vunpack.c.l.b16 %v192
    %v843 = vunpack.c.h.b16 %v192
    %v844 = vunpack.c.l.b16 %v193
    %v845 = vunpack.c.h.b16 %v193
    %v846 = vunpack.c.l.b16 %v194
    %v847 = vunpack.c.h.b16 %v194
    %v848 = vunpack.c.l.b16 %v195
    %v849 = vunpack.c.h.b16 %v195
    %v850 = vunpack.c.l.b16 %v196
    %v851 = vunpack.c.h.b16 %v196
    %v852 = vunpack.c.l.b16 %v197
    %v853 = vunpack.c.h.b16 %v197
    %v854 = vunpack.c.l.b16 %v198
    %v855 = vunpack.c.h.b16 %v198
    %v856 = vunpack.c.l.b16 %v199
    %v857 = vunpack.c.h.b16 %v199
    %v858 = vunpack.c.l.b16 %v200
    %v859 = vunpack.c.h.b16 %v200
    %v860 = vunpack.c.l.b16 %v201
    %v861 = vunpack.c.h.b16 %v201
    %v862 = vunpack.c.l.b16 %v202
    %v863 = vunpack.c.h.b16 %v202
    %v864 = vunpack.c.l.b16 %v203
    %v865 = vunpack.c.h.b16 %v203
    %v866 = vunpack.c.l.b16 %v204
    %v867 = vunpack.c.h.b16 %v204
    %v868 = vunpack.c.l.b16 %v205
    %v869 = vunpack.c.h.b16 %v205
    %v870 = vunpack.c.l.b16 %v206
    %v871 = vunpack.c.h.b16 %v206
    %v872 = vunpack.c.l.b16 %v207
    %v873 = vunpack.c.h.b16 %v207
    %v874 = vunpack.c.l.b16 %v208
    %v875 = vunpack.c.h.b16 %v208
    %v876 = vunpack.c.l.b16 %v209
    %v877 = vunpack.c.h.b16 %v209
    %v878 = vunpack.c.l.b16 %v210
    %v879 = vunpack.c.h.b16 %v210
    %v880 = vunpack.c.l.b16 %v211
    %v881 = vunpack.c.h.b16 %v211
    %v882 = vunpack.c.l.b16 %v212
    %v883 = vunpack.c.h.b16 %v212
    %v884 = vunpack.c.l.b16 %v213
    %v885 = vunpack.c.h.b16 %v213
    %v886 = vunpack.c.l.b16 %v214
    %v887 = vunpack.c.h.b16 %v214
    %v888 = vunpack.c.l.b16 %v215
    %v889 = vunpack.c.h.b16 %v215
    %v890 = vunpack.c.l.b16 %v216
    %v891 = vunpack.c.h.b16 %v216
    %v892 = vunpack.c.l.b16 %v217
    %v893 = vunpack.c.h.b16 %v217
    %v894 = vunpack.c.l.b16 %v218
    %v895 = vunpack.c.h.b16 %v218
    %v896 = vunpack.c.l.b16 %v219
    %v897 = vunpack.c.h.b16 %v219
    %v898 = vunpack.c.l.b16 %v220
    %v899 = vunpack.c.h.b16 %v220
    %v900 = vunpack.c.l.b16 %v221
    %v901 = vunpack.c.h.b16 %v221
    %v902 = vunpack.c.l.b16 %v222
    %v903 = vunpack.c.h.b16 %v222
    %v904 = vunpack.c.l.b16 %v223
    %v905 = vunpack.c.h.b16 %v223
    %v906 = vunpack.c.l.b16 %v224
    %v907 = vunpack.c.h.b16 %v224
    %v908 = vunpack.c.l.b16 %v225
    %v909 = vunpack.c.h.b16 %v225
    %v910 = vunpack.c.l.b16 %v226
    %v911 = vunpack.c.h.b16 %v226
    %v912 = vunpack.c.l.b16 %v227
    %v913 = vunpack.c.h.b16 %v227
    %v914 = vunpack.c.l.b16 %v228
    %v915 = vunpack.c.h.b16 %v228
    %v916 = vunpack.c.l.b16 %v229
    %v917 = vunpack.c.h.b16 %v229
    %v918 = vunpack.c.l.b16 %v230
    %v919 = vunpack.c.h.b16 %v230
    %v920 = vunpack.c.l.b16 %v231
    %v921 = vunpack.c.h.b16 %v231
    %v922 = vunpack.c.l.b16 %v232
    %v923 = vunpack.c.h.b16 %v232
    %v924 = vunpack.c.l.b16 %v233
    %v925 = vunpack.c.h.b16 %v233
    %v926 = vunpack.c.l.b16 %v234
    %v927 = vunpack.c.h.b16 %v234
    %v928 = vunpack.c.l.b16 %v235
    %v929 = vunpack.c.h.b16 %v235
    %v930 = vunpack.c.l.b16 %v236
    %v931 = vunpack.c.h.b16 %v236
    %v932 = vunpack.c.l.b16 %v237
    %v933 = vunpack.c.h.b16 %v237
    %v934 = vunpack.c.l.b16 %v238
    %v935 = vunpack.c.h.b16 %v238
    %v936 = vunpack.c.l.b16 %v239
    %v937 = vunpack.c.h.b16 %v239
    %v938 = vunpack.c.l.b16 %v240
    %v939 = vunpack.c.h.b16 %v240
    %v940 = vunpack.c.l.b16 %v241
    %v941 = vunpack.c.h.b16 %v241
    %v942 = vunpack.c.l.b16 %v242
    %v943 = vunpack.c.h.b16 %v242
    %v944 = vunpack.c.l.b16 %v243
    %v945 = vunpack.c.h.b16 %v243
    %v946 = vunpack.c.l.b16 %v244
    %v947 = vunpack.c.h.b16 %v244
    %v948 = vunpack.c.l.b16 %v245
    %v949 = vunpack.c.h.b16 %v245
    %v950 = vunpack.c.l.b16 %v246
    %v951 = vunpack.c.h.b16 %v246
    %v952 = vunpack.c.l.b16 %v247
    %v953 = vunpack.c.h.b16 %v247
    %v954 = vunpack.c.l.b16 %v248
    %v955 = vunpack.c.h.b16 %v248
    %v956 = vunpack.c.l.b16 %v249
    %v957 = vunpack.c.h.b16 %v249
    %v958 = vunpack.c.l.b16 %v250
    %v959 = vunpack.c.h.b16 %v250
    %v960 = vunpack.c.l.b16 %v251
    %v961 = vunpack.c.h.b16 %v251
    %v962 = vunpack.c.l.b16 %v252
    %v963 = vunpack.c.h.b16 %v252
    %v964 = vunpack.c.l.b16 %v253
    %v965 = vunpack.c.h.b16 %v253
    %v966 = vunpack.c.l.b16 %v254
    %v967 = vunpack.c.h.b16 %v254
    %v968 = vunpack.c.l.b16 %v255
    %v969 = vunpack.c.h.b16 %v255
    %v970 = vunpack.c.l.b16 %v256
    %v971 = vunpack.c.h.b16 %v256
    %v972 = vunpack.c.l.b16 %v257
    %v973 = vunpack.c.h.b16 %v257
    %v974 = vunpack.c.l.b16 %v258
    %v975 = vunpack.c.h.b16 %v258
    %v976 = vunpack.c.l.b16 %v259
    %v977 = vunpack.c.h.b16 %v259
    %v978 = vunpack.c.l.b16 %v260
    %v979 = vunpack.c.h.b16 %v260
    %v980 = vunpack.c.l.b16 %v261
    %v981 = vunpack.c.h.b16 %v261
    %v982 = vunpack.c.l.b16 %v262
    %v983 = vunpack.c.h.b16 %v262
    %v984 = vunpack.c.l.b16 %v263
    %v985 = vunpack.c.h.b16 %v263
    %v986 = vunpack.c.l.b16 %v264
    %v987 = vunpack.c.h.b16 %v264
    %v988 = vunpack.c.l.b16 %v265
    %v989 = vunpack.c.h.b16 %v265
    %v990 = vunpack.c.l.b16 %v266
    %v991 = vunpack.c.h.b16 %v266
    %v992 = vunpack.c.l.b16 %v267
    %v993 = vunpack.c.h.b16 %v267
    %v994 = vunpack.c.l.b16 %v268
    %v995 = vunpack.c.h.b16 %v268
    %v996 = vunpack.c.l.b16 %v269
    %v997 = vunpack.c.h.b16 %v269
    %v998 = vunpack.c.l.b16 %v270
    %v999 = vunpack.c.h.b16 %v270
    %v1000 = vunpack.c.l.b16 %v271
    %v1001 = vunpack.c.h.b16 %v271
    %v1002 = vunpack.c.l.b16 %v272
    %v1003 = vunpack.c.h.b16 %v272
    %v1004 = vunpack.c.l.b16 %v273
    %v1005 = vunpack.c.h.b16 %v273
    %v1006 = vunpack.c.l.b16 %v274
    %v1007 = vunpack.c.h.b16 %v274
    %v1008 = vunpack.c.l.b16 %v275
    %v1009 = vunpack.c.h.b16 %v275
    %v1010 = vunpack.c.l.b16 %v276
    %v1011 = vunpack.c.h.b16 %v276
    %v1012 = vunpack.c.l.b16 %v277
    %v1013 = vunpack.c.h.b16 %v277
    %v1014 = vunpack.c.l.b16 %v278
    %v1015 = vunpack.c.h.b16 %v278
    %v1016 = vunpack.c.l.b16 %v279
    %v1017 = vunpack.c.h.b16 %v279
    %v1018 = vunpack.c.l.b16 %v280
    %v1019 = vunpack.c.h.b16 %v280
    %v1020 = vunpack.c.l.b16 %v281
    %v1021 = vunpack.c.h.b16 %v281
    %v1022 = vunpack.c.l.b16 %v282
    %v1023 = vunpack.c.h.b16 %v282
    %v1024 = vunpack.c.l.b16 %v283
    %v1025 = vunpack.c.h.b16 %v283
    %v1026 = vunpack.c.l.b16 %v284
    %v1027 = vunpack.c.h.b16 %v284
    %v1028 = vunpack.c.l.b16 %v285
    %v1029 = vunpack.c.h.b16 %v285
    %v1030 = vunpack.c.l.b16 %v286
    %v1031 = vunpack.c.h.b16 %v286
    %v1032 = vunpack.c.l.b16 %v287
    %v1033 = vunpack.c.h.b16 %v287
    %v1034 = vunpack.c.l.b16 %v288
    %v1035 = vunpack.c.h.b16 %v288
    %v1036 = vunpack.c.l.b16 %v289
    %v1037 = vunpack.c.h.b16 %v289
    %v1038 = vunpack.c.l.b16 %v290
    %v1039 = vunpack.c.h.b16 %v290
    %v1040 = vunpack.c.l.b16 %v291
    %v1041 = vunpack.c.h.b16 %v291
    %v1042 = vunpack.c.l.b16 %v292
    %v1043 = vunpack.c.h.b16 %v292
    %v1044 = vunpack.c.l.b16 %v293
    %v1045 = vunpack.c.h.b16 %v293
    %v1046 = vunpack.c.l.b16 %v294
    %v1047 = vunpack.c.h.b16 %v294
    %v1048 = vunpack.c.l.b16 %v295
    %v1049 = vunpack.c.h.b16 %v295
    %v1050 = vunpack.c.l.b16 %v296
    %v1051 = vunpack.c.h.b16 %v296
    %v1052 = vunpack.c.l.b16 %v297
    %v1053 = vunpack.c.h.b16 %v297
    %v1054 = vunpack.c.l.b16 %v298
    %v1055 = vunpack.c.h.b16 %v298
    %v1056 = vunpack.c.l.b16 %v299
    %v1057 = vunpack.c.h.b16 %v299
    %v1058 = vunpack.c.l.b16 %v300
    %v1059 = vunpack.c.h.b16 %v300
    %v1060 = vunpack.c.l.b16 %v301
    %v1061 = vunpack.c.h.b16 %v301
    %v1062 = vunpack.c.l.b16 %v302
    %v1063 = vunpack.c.h.b16 %v302
    %v1064 = vunpack.c.l.b16 %v303
    %v1065 = vunpack.c.h.b16 %v303
    %v1066 = vunpack.c.l.b16 %v304
    %v1067 = vunpack.c.h.b16 %v304
    %v1068 = vunpack.c.l.b16 %v305
    %v1069 = vunpack.c.h.b16 %v305
    %v1070 = vunpack.c.l.b16 %v306
    %v1071 = vunpack.c.h.b16 %v306
    %v1072 = vunpack.c.l.b16 %v307
    %v1073 = vunpack.c.h.b16 %v307
    %v1074 = vunpack.c.l.b16 %v308
    %v1075 = vunpack.c.h.b16 %v308
    %v1076 = vunpack.c.l.b16 %v309
    %v1077 = vunpack.c.h.b16 %v309
    %v1078 = vunpack.c.l.b16 %v310
    %v1079 = vunpack.c.h.b16 %v310
    %v1080 = vunpack.c.l.b16 %v311
    %v1081 = vunpack.c.h.b16 %v311
    %v1082 = vunpack.c.l.b16 %v312
    %v1083 = vunpack.c.h.b16 %v312
    %v1084 = vunpack.c.l.b16 %v313
    %v1085 = vunpack.c.h.b16 %v313
    %v1086 = vunpack.c.l.b16 %v314
    %v1087 = vunpack.c.h.b16 %v314
    %v1088 = vunpack.c.l.b16 %v315
    %v1089 = vunpack.c.h.b16 %v315
    %v1090 = vunpack.c.l.b16 %v316
    %v1091 = vunpack.c.h.b16 %v316
    %v1092 = vunpack.c.l.b16 %v317
    %v1093 = vunpack.c.h.b16 %v317
    %v1094 = vunpack.c.l.b16 %v318
    %v1095 = vunpack.c.h.b16 %v318
    %v1096 = vunpack.c.l.b16 %v319
    %v1097 = vunpack.c.h.b16 %v319
    %v1098 = vunpack.c.l.b16 %v320
    %v1099 = vunpack.c.h.b16 %v320
    %v1100 = vunpack.c.l.b16 %v321
    %v1101 = vunpack.c.h.b16 %v321
    %v1102 = vunpack.c.l.b16 %v322
    %v1103 = vunpack.c.h.b16 %v322
    %v1104 = vunpack.c.l.b16 %v323
    %v1105 = vunpack.c.h.b16 %v323
    %v1106 = vunpack.c.l.b16 %v324
    %v1107 = vunpack.c.h.b16 %v324
    %v1108 = vunpack.c.l.b16 %v325
    %v1109 = vunpack.c.h.b16 %v325
    %v1110 = vunpack.c.l.b16 %v326
    %v1111 = vunpack.c.h.b16 %v326
    %v1112 = vunpack.c.l.b16 %v327
    %v1113 = vunpack.c.h.b16 %v327
    %v1114 = vunpack.c.l.b16 %v328
    %v1115 = vunpack.c.h.b16 %v328
    %v1116 = vunpack.c.l.b16 %v329
    %v1117 = vunpack.c.h.b16 %v329
    %v1118 = vunpack.c.l.b16 %v330
    %v1119 = vunpack.c.h.b16 %v330
    %v1120 = vunpack.c.l.b16 %v331
    %v1121 = vunpack.c.h.b16 %v331
    %v1122 = vunpack.c.l.b16 %v332
    %v1123 = vunpack.c.h.b16 %v332
    %v1124 = vunpack.c.l.b16 %v333
    %v1125 = vunpack.c.h.b16 %v333
    %v1126 = vunpack.c.l.b16 %v334
    %v1127 = vunpack.c.h.b16 %v334
    %v1128 = vunpack.c.l.b16 %v335
    %v1129 = vunpack.c.h.b16 %v335
    %v1130 = vunpack.c.l.b16 %v336
    %v1131 = vunpack.c.h.b16 %v336
    %v1132 = vunpack.c.l.b16 %v337
    %v1133 = vunpack.c.h.b16 %v337
    %v1134 = vunpack.c.l.b16 %v338
    %v1135 = vunpack.c.h.b16 %v338
    %v1136 = vunpack.c.l.b16 %v339
    %v1137 = vunpack.c.h.b16 %v339
    %v1138 = vunpack.c.l.b16 %v340
    %v1139 = vunpack.c.h.b16 %v340
    %v1140 = vunpack.c.l.b16 %v341
    %v1141 = vunpack.c.h.b16 %v341
    %v1142 = vunpack.c.l.b16 %v342
    %v1143 = vunpack.c.h.b16 %v342
    %v1144 = vunpack.c.l.b16 %v343
    %v1145 = vunpack.c.h.b16 %v343
    %v1146 = vunpack.c.l.b16 %v344
    %v1147 = vunpack.c.h.b16 %v344
    %v1148 = vunpack.c.l.b16 %v345
    %v1149 = vunpack.c.h.b16 %v345
    %v1150 = vunpack.c.l.b16 %v346
    %v1151 = vunpack.c.h.b16 %v346
    %v1152 = vunpack.c.l.b16 %v347
    %v1153 = vunpack.c.h.b16 %v347
    %v1154 = vunpack.c.l.b16 %v348
    %v1155 = vunpack.c.h.b16 %v348
    %v1156 = vunpack.c.l.b16 %v349
    %v1157 = vunpack.c.h.b16 %v349
    %v1158 = vunpack.c.l.b16 %v350
    %v1159 = vunpack.c.h.b16 %v350
    %v1160 = vunpack.c.l.b16 %v351
    %v1161 = vunpack.c.h.b16 %v351
    %v1162 = vunpack.c.l.b16 %v352
    %v1163 = vunpack.c.h.b16 %v352
    %v1164 = vunpack.c.l.b16 %v353
    %v1165 = vunpack.c.h.b16 %v353
    %v1166 = vunpack.c.l.b16 %v354
    %v1167 = vunpack.c.h.b16 %v354
    %v1168 = vunpack.c.l.b16 %v355
    %v1169 = vunpack.c.h.b16 %v355
    %v1170 = vunpack.c.l.b16 %v356
    %v1171 = vunpack.c.h.b16 %v356
    %v1172 = vunpack.c.l.b16 %v357
    %v1173 = vunpack.c.h.b16 %v357
    %v1174 = vunpack.c.l.b16 %v358
    %v1175 = vunpack.c.h.b16 %v358
    %v1176 = vunpack.c.l.b16 %v359
    %v1177 = vunpack.c.h.b16 %v359
    %v1178 = vunpack.c.l.b16 %v360
    %v1179 = vunpack.c.h.b16 %v360
    %v1180 = vunpack.c.l.b16 %v361
    %v1181 = vunpack.c.h.b16 %v361
    %v1182 = vunpack.c.l.b16 %v362
    %v1183 = vunpack.c.h.b16 %v362
    %v1184 = vunpack.c.l.b16 %v363
    %v1185 = vunpack.c.h.b16 %v363
    %v1186 = vunpack.c.l.b16 %v364
    %v1187 = vunpack.c.h.b16 %v364
    %v1188 = vunpack.c.l.b16 %v365
    %v1189 = vunpack.c.h.b16 %v365
    %v1190 = vunpack.c.l.b16 %v366
    %v1191 = vunpack.c.h.b16 %v366
    %v1192 = vunpack.c.l.b16 %v367
    %v1193 = vunpack.c.h.b16 %v367
    %v1194 = vunpack.c.l.b16 %v368
    %v1195 = vunpack.c.h.b16 %v368
    %v1196 = vunpack.c.l.b16 %v369
    %v1197 = vunpack.c.h.b16 %v369
    %v1198 = vunpack.c.l.b16 %v370
    %v1199 = vunpack.c.h.b16 %v370
    %v1200 = vunpack.c.l.b16 %v371
    %v1201 = vunpack.c.h.b16 %v371
    %v1202 = vunpack.c.l.b16 %v372
    %v1203 = vunpack.c.h.b16 %v372
    %v1204 = vunpack.c.l.b16 %v373
    %v1205 = vunpack.c.h.b16 %v373
    %v1206 = vunpack.c.l.b16 %v374
    %v1207 = vunpack.c.h.b16 %v374
    %v1208 = vunpack.c.l.b16 %v375
    %v1209 = vunpack.c.h.b16 %v375
    %v1210 = vunpack.c.l.b16 %v376
    %v1211 = vunpack.c.h.b16 %v376
    %v1212 = vunpack.c.l.b16 %v377
    %v1213 = vunpack.c.h.b16 %v377
    %v1214 = vunpack.c.l.b16 %v378
    %v1215 = vunpack.c.h.b16 %v378
    %v1216 = vunpack.c.l.b16 %v379
    %v1217 = vunpack.c.h.b16 %v379
    %v1218 = vunpack.c.l.b16 %v380
    %v1219 = vunpack.c.h.b16 %v380
    %v1220 = vunpack.c.l.b16 %v381
    %v1221 = vunpack.c.h.b16 %v381
    %v1222 = vunpack.c.l.b16 %v382
    %v1223 = vunpack.c.h.b16 %v382
    %v1224 = vunpack.c.l.b16 %v383
    %v1225 = vunpack.c.h.b16 %v383
    %v1226 = vunpack.c.l.b16 %v384
    %v1227 = vunpack.c.h.b16 %v384
    %v1228 = vunpack.c.l.b16 %v385
    %v1229 = vunpack.c.h.b16 %v385
    %v1230 = vunpack.c.l.b16 %v386
    %v1231 = vunpack.c.h.b16 %v386
    %v1232 = vunpack.c.l.b16 %v387
    %v1233 = vunpack.c.h.b16 %v387
    %v1234 = vunpack.c.l.b16 %v388
    %v1235 = vunpack.c.h.b16 %v388
    %v1236 = vunpack.c.l.b16 %v389
    %v1237 = vunpack.c.h.b16 %v389
    %v1238 = vunpack.c.l.b16 %v390
    %v1239 = vunpack.c.h.b16 %v390
    %v1240 = vunpack.c.l.b16 %v391
    %v1241 = vunpack.c.h.b16 %v391
    %v1242 = vunpack.c.l.b16 %v392
    %v1243 = vunpack.c.h.b16 %v392
    %v1244 = vunpack.c.l.b16 %v393
    %v1245 = vunpack.c.h.b16 %v393
    %v1246 = vunpack.c.l.b16 %v394
    %v1247 = vunpack.c.h.b16 %v394
    %v1248 = vunpack.c.l.b16 %v395
    %v1249 = vunpack.c.h.b16 %v395
    %v1250 = vunpack.c.l.b16 %v396
    %v1251 = vunpack.c.h.b16 %v396
    %v1252 = vunpack.c.l.b16 %v397
    %v1253 = vunpack.c.h.b16 %v397
    %v1254 = vunpack.c.l.b16 %v398
    %v1255 = vunpack.c.h.b16 %v398
    %v1256 = vunpack.c.l.b16 %v399
    %v1257 = vunpack.c.h.b16 %v399
    %v1258 = vunpack.c.l.b16 %v400
    %v1259 = vunpack.c.h.b16 %v400
    %v1260 = vunpack.c.l.b16 %v401
    %v1261 = vunpack.c.h.b16 %v401
    %v1262 = vunpack.c.l.b16 %v402
    %v1263 = vunpack.c.h.b16 %v402
    %v1264 = vunpack.c.l.b16 %v403
    %v1265 = vunpack.c.h.b16 %v403
    %v1266 = vunpack.c.l.b16 %v404
    %v1267 = vunpack.c.h.b16 %v404
    %v1268 = vunpack.c.l.b16 %v405
    %v1269 = vunpack.c.h.b16 %v405
    %v1270 = vunpack.c.l.b16 %v406
    %v1271 = vunpack.c.h.b16 %v406
    %v1272 = vunpack.c.l.b16 %v407
    %v1273 = vunpack.c.h.b16 %v407
    %v1274 = vunpack.c.l.b16 %v408
    %v1275 = vunpack.c.h.b16 %v408
    %v1276 = vunpack.c.l.b16 %v409
    %v1277 = vunpack.c.h.b16 %v409
    %v1278 = vunpack.c.l.b16 %v410
    %v1279 = vunpack.c.h.b16 %v410
    %v1280 = vunpack.c.l.b16 %v411
    %v1281 = vunpack.c.h.b16 %v411
    %v1282 = vunpack.c.l.b16 %v412
    %v1283 = vunpack.c.h.b16 %v412
    %v1284 = vunpack.c.l.b16 %v413
    %v1285 = vunpack.c.h.b16 %v413
    %v1286 = vunpack.c.l.b16 %v414
    %v1287 = vunpack.c.h.b16 %v414
    %v1288 = vunpack.c.l.b16 %v415
    %v1289 = vunpack.c.h.b16 %v415
    %v1290 = vunpack.c.l.b16 %v416
    %v1291 = vunpack.c.h.b16 %v416
    %v1292 = vunpack.c.l.b16 %v417
    %v1293 = vunpack.c.h.b16 %v417
    %v1294 = vunpack.c.l.b16 %v418
    %v1295 = vunpack.c.h.b16 %v418
    %v1296 = vunpack.c.l.b16 %v419
    %v1297 = vunpack.c.h.b16 %v419
    %v1298 = vunpack.c.l.b16 %v420
    %v1299 = vunpack.c.h.b16 %v420
    %v1300 = vunpack.c.l.b16 %v421
    %v1301 = vunpack.c.h.b16 %v421
    %v1302 = vunpack.c.l.b16 %v422
    %v1303 = vunpack.c.h.b16 %v422
    %v1304 = vunpack.c.l.b16 %v423
    %v1305 = vunpack.c.h.b16 %v423
    %v1306 = vunpack.c.l.b16 %v424
    %v1307 = vunpack.c.h.b16 %v424
    %v1308 = vunpack.c.l.b16 %v425
    %v1309 = vunpack.c.h.b16 %v425
    %v1310 = vunpack.c.l.b16 %v426
    %v1311 = vunpack.c.h.b16 %v426
    %v1312 = vunpack.c.l.b16 %v427
    %v1313 = vunpack.c.h.b16 %v427
    %v1314 = vunpack.c.l.b16 %v428
    %v1315 = vunpack.c.h.b16 %v428
    %v1316 = vunpack.c.l.b16 %v429
    %v1317 = vunpack.c.h.b16 %v429
    %v1318 = vunpack.c.l.b16 %v430
    %v1319 = vunpack.c.h.b16 %v430
    %v1320 = vunpack.c.l.b16 %v431
    %v1321 = vunpack.c.h.b16 %v431
    %v1322 = vunpack.c.l.b16 %v432
    %v1323 = vunpack.c.h.b16 %v432
    %v1324 = vunpack.c.l.b16 %v433
    %v1325 = vunpack.c.h.b16 %v433
    %v1326 = vpack.c.b16 %v756, %v750
    %v1327 = vpack.c.b16 %v757, %v751
    %v1328 = vpack.c.b16 %v758, %v752
    %v1329 = vpack.c.b16 %v759, %v753
    %v1330 = vpack.c.b16 %v760, %v754
    %v1331 = vpack.c.b16 %v761, %v755
    %v1332 = vpack.c.b16 %v768, %v762
    %v1333 = vpack.c.b16 %v769, %v763
    %v1334 = vpack.c.b16 %v770, %v764
    %v1335 = vpack.c.b16 %v771, %v765
    %v1336 = vpack.c.b16 %v772, %v766
    %v1337 = vpack.c.b16 %v773, %v767
    %v1338 = vpack.c.b16 %v780, %v774
    %v1339 = vpack.c.b16 %v781, %v775
    %v1340 = vpack.c.b16 %v782, %v776
    %v1341 = vpack.c.b16 %v783, %v777
    %v1342 = vpack.c.b16 %v784, %v778
    %v1343 = vpack.c.b16 %v785, %v779
    %v1344 = vpack.c.b16 %v792, %v786
    %v1345 = vpack.c.b16 %v793, %v787
    %v1346 = vpack.c.b16 %v794, %v788
    %v1347 = vpack.c.b16 %v795, %v789
    %v1348 = vpack.c.b16 %v796, %v790
    %v1349 = vpack.c.b16 %v797, %v791
    %v1350 = vpack.c.b16 %v804, %v798
    %v1351 = vpack.c.b16 %v805, %v799
    %v1352 = vpack.c.b16 %v806, %v800
    %v1353 = vpack.c.b16 %v807, %v801
    %v1354 = vpack.c.b16 %v808, %v802
    %v1355 = vpack.c.b16 %v809, %v803
    %v1356 = vpack.c.b16 %v816, %v810
    %v1357 = vpack.c.b16 %v817, %v811
    %v1358 = vpack.c.b16 %v818, %v812
    %v1359 = vpack.c.b16 %v819, %v813
    %v1360 = vpack.c.b16 %v820, %v814
    %v1361 = vpack.c.b16 %v821, %v815
    %v1362 = vpack.c.b16 %v828, %v822
    %v1363 = vpack.c.b16 %v829, %v823
    %v1364 = vpack.c.b16 %v830, %v824
    %v1365 = vpack.c.b16 %v831, %v825
    %v1366 = vpack.c.b16 %v832, %v826
    %v1367 = vpack.c.b16 %v833, %v827
    %v1368 = vpack.c.b16 %v840, %v834
    %v1369 = vpack.c.b16 %v841, %v835
    %v1370 = vpack.c.b16 %v842, %v836
    %v1371 = vpack.c.b16 %v843, %v837
    %v1372 = vpack.c.b16 %v844, %v838
    %v1373 = vpack.c.b16 %v845, %v839
    %v1374 = vpack.c.b16 %v852, %v846
    %v1375 = vpack.c.b16 %v853, %v847
    %v1376 = vpack.c.b16 %v854, %v848
    %v1377 = vpack.c.b16 %v855, %v849
    %v1378 = vpack.c.b16 %v856, %v850
    %v1379 = vpack.c.b16 %v857, %v851
    %v1380 = vpack.c.b16 %v864, %v858
    %v1381 = vpack.c.b16 %v865, %v859
    %v1382 = vpack.c.b16 %v866, %v860
    %v1383 = vpack.c.b16 %v867, %v861
    %v1384 = vpack.c.b16 %v868, %v862
    %v1385 = vpack.c.b16 %v869, %v863
    %v1386 = vpack.c.b16 %v876, %v870
    %v1387 = vpack.c.b16 %v877, %v871
    %v1388 = vpack.c.b16 %v878, %v872
    %v1389 = vpack.c.b16 %v879, %v873
    %v1390 = vpack.c.b16 %v880, %v874
    %v1391 = vpack.c.b16 %v881, %v875
    %v1392 = vpack.c.b16 %v888, %v882
    %v1393 = vpack.c.b16 %v889, %v883
    %v1394 = vpack.c.b16 %v890, %v884
    %v1395 = vpack.c.b16 %v891, %v885
    %v1396 = vpack.c.b16 %v892, %v886
    %v1397 = vpack.c.b16 %v893, %v887
    %v1398 = vpack.c.b16 %v900, %v894
    %v1399 = vpack.c.b16 %v901, %v895
    %v1400 = vpack.c.b16 %v902, %v896
    %v1401 = vpack.c.b16 %v903, %v897
    %v1402 = vpack.c.b16 %v904, %v898
    %v1403 = vpack.c.b16 %v905, %v899
    %v1404 = vpack.c.b16 %v912, %v906
    %v1405 = vpack.c.b16 %v913, %v907
    %v1406 = vpack.c.b16 %v914, %v908
    %v1407 = vpack.c.b16 %v915, %v909
    %v1408 = vpack.c.b16 %v916, %v910
    %v1409 = vpack.c.b16 %v917, %v911
    %v1410 = vpack.c.b16 %v924, %v918
    %v1411 = vpack.c.b16 %v925, %v919
    %v1412 = vpack.c.b16 %v926, %v920
    %v1413 = vpack.c.b16 %v927, %v921
    %v1414 = vpack.c.b16 %v928, %v922
    %v1415 = vpack.c.b16 %v929, %v923
    %v1416 = vpack.c.b16 %v936, %v930
    %v1417 = vpack.c.b16 %v937, %v931
    %v1418 = vpack.c.b16 %v938, %v932
    %v1419 = vpack.c.b16 %v939, %v933
    %v1420 = vpack.c.b16 %v940, %v934
    %v1421 = vpack.c.b16 %v941, %v935
    %v1422 = vpack.c.b16 %v948, %v942
    %v1423 = vpack.c.b16 %v949, %v943
    %v1424 = vpack.c.b16 %v950, %v944
    %v1425 = vpack.c.b16 %v951, %v945
    %v1426 = vpack.c.b16 %v952, %v946
    %v1427 = vpack.c.b16 %v953, %v947
    %v1428 = vpack.c.b16 %v960, %v954
    %v1429 = vpack.c.b16 %v961, %v955
    %v1430 = vpack.c.b16 %v962, %v956
    %v1431 = vpack.c.b16 %v963, %v957
    %v1432 = vpack.c.b16 %v964, %v958
    %v1433 = vpack.c.b16 %v965, %v959
    %v1434 = vpack.c.b16 %v972, %v966
    %v1435 = vpack.c.b16 %v973, %v967
    %v1436 = vpack.c.b16 %v974, %v968
    %v1437 = vpack.c.b16 %v975, %v969
    %v1438 = vpack.c.b16 %v976, %v970
    %v1439 = vpack.c.b16 %v977, %v971
    %v1440 = vpack.c.b16 %v984, %v978
    %v1441 = vpack.c.b16 %v985, %v979
    %v1442 = vpack.c.b16 %v986, %v980
    %v1443 = vpack.c.b16 %v987, %v981
    %v1444 = vpack.c.b16 %v988, %v982
    %v1445 = vpack.c.b16 %v989, %v983
    %v1446 = vpack.c.b16 %v996, %v990
    %v1447 = vpack.c.b16 %v997, %v991
    %v1448 = vpack.c.b16 %v998, %v992
    %v1449 = vpack.c.b16 %v999, %v993
    %v1450 = vpack.c.b16 %v1000, %v994
    %v1451 = vpack.c.b16 %v1001, %v995
    %v1452 = vpack.c.b16 %v1008, %v1002
    %v1453 = vpack.c.b16 %v1009, %v1003
    %v1454 = vpack.c.b16 %v1010, %v1004
    %v1455 = vpack.c.b16 %v1011, %v1005
    %v1456 = vpack.c.b16 %v1012, %v1006
    %v1457 = vpack.c.b16 %v1013, %v1007
    %v1458 = vpack.c.b16 %v1020, %v1014
    %v1459 = vpack.c.b16 %v1021, %v1015
    %v1460 = vpack.c.b16 %v1022, %v1016
    %v1461 = vpack.c.b16 %v1023, %v1017
    %v1462 = vpack.c.b16 %v1024, %v1018
    %v1463 = vpack.c.b16 %v1025, %v1019
    %v1464 = vpack.c.b16 %v1032, %v1026
    %v1465 = vpack.c.b16 %v1033, %v1027
    %v1466 = vpack.c.b16 %v1034, %v1028
    %v1467 = vpack.c.b16 %v1035, %v1029
    %v1468 = vpack.c.b16 %v1036, %v1030
    %v1469 = vpack.c.b16 %v1037, %v1031
    %v1470 = vpack.c.b16 %v1044, %v1038
    %v1471 = vpack.c.b16 %v1045, %v1039
    %v1472 = vpack.c.b16 %v1046, %v1040
    %v1473 = vpack.c.b16 %v1047, %v1041
    %v1474 = vpack.c.b16 %v1048, %v1042
    %v1475 = vpack.c.b16 %v1049, %v1043
    %v1476 = vpack.c.b16 %v1056, %v1050
    %v1477 = vpack.c.b16 %v1057, %v1051
    %v1478 = vpack.c.b16 %v1058, %v1052
    %v1479 = vpack.c.b16 %v1059, %v1053
    %v1480 = vpack.c.b16 %v1060, %v1054
    %v1481 = vpack.c.b16 %v1061, %v1055
    %v1482 = vpack.c.b16 %v1068, %v1062
    %v1483 = vpack.c.b16 %v1069, %v1063
    %v1484 = vpack.c.b16 %v1070, %v1064
    %v1485 = vpack.c.b16 %v1071, %v1065
    %v1486 = vpack.c.b16 %v1072, %v1066
    %v1487 = vpack.c.b16 %v1073, %v1067
    %v1488 = vpack.c.b16 %v1080, %v1074
    %v1489 = vpack.c.b16 %v1081, %v1075
    %v1490 = vpack.c.b16 %v1082, %v1076
    %v1491 = vpack.c.b16 %v1083, %v1077
    %v1492 = vpack.c.b16 %v1084, %v1078
    %v1493 = vpack.c.b16 %v1085, %v1079
    %v1494 = vpack.c.b16 %v1092, %v1086
    %v1495 = vpack.c.b16 %v1093, %v1087
    %v1496 = vpack.c.b16 %v1094, %v1088
    %v1497 = vpack.c.b16 %v1095, %v1089
    %v1498 = vpack.c.b16 %v1096, %v1090
    %v1499 = vpack.c.b16 %v1097, %v1091
    %v1500 = vpack.c.b16 %v1104, %v1098
    %v1501 = vpack.c.b16 %v1105, %v1099
    %v1502 = vpack.c.b16 %v1106, %v1100
    %v1503 = vpack.c.b16 %v1107, %v1101
    %v1504 = vpack.c.b16 %v1108, %v1102
    %v1505 = vpack.c.b16 %v1109, %v1103
    %v1506 = vpack.c.b16 %v1116, %v1110
    %v1507 = vpack.c.b16 %v1117, %v1111
    %v1508 = vpack.c.b16 %v1118, %v1112
    %v1509 = vpack.c.b16 %v1119, %v1113
    %v1510 = vpack.c.b16 %v1120, %v1114
    %v1511 = vpack.c.b16 %v1121, %v1115
    %v1512 = vpack.c.b16 %v1128, %v1122
    %v1513 = vpack.c.b16 %v1129, %v1123
    %v1514 = vpack.c.b16 %v1130, %v1124
    %v1515 = vpack.c.b16 %v1131, %v1125
    %v1516 = vpack.c.b16 %v1132, %v1126
    %v1517 = vpack.c.b16 %v1133, %v1127
    %v1518 = vpack.c.b16 %v1140, %v1134
    %v1519 = vpack.c.b16 %v1141, %v1135
    %v1520 = vpack.c.b16 %v1142, %v1136
    %v1521 = vpack.c.b16 %v1143, %v1137
    %v1522 = vpack.c.b16 %v1144, %v1138
    %v1523 = vpack.c.b16 %v1145, %v1139
    %v1524 = vpack.c.b16 %v1152, %v1146
    %v1525 = vpack.c.b16 %v1153, %v1147
    %v1526 = vpack.c.b16 %v1154, %v1148
    %v1527 = vpack.c.b16 %v1155, %v1149
    %v1528 = vpack.c.b16 %v1156, %v1150
    %v1529 = vpack.c.b16 %v1157, %v1151
    %v1530 = vpack.c.b16 %v1164, %v1158
    %v1531 = vpack.c.b16 %v1165, %v1159
    %v1532 = vpack.c.b16 %v1166, %v1160
    %v1533 = vpack.c.b16 %v1167, %v1161
    %v1534 = vpack.c.b16 %v1168, %v1162
    %v1535 = vpack.c.b16 %v1169, %v1163
    %v1536 = vpack.c.b16 %v1176, %v1170
    %v1537 = vpack.c.b16 %v1177, %v1171
    %v1538 = vpack.c.b16 %v1178, %v1172
    %v1539 = vpack.c.b16 %v1179, %v1173
    %v1540 = vpack.c.b16 %v1180, %v1174
    %v1541 = vpack.c.b16 %v1181, %v1175
    %v1542 = vpack.c.b16 %v1188, %v1182
    %v1543 = vpack.c.b16 %v1189, %v1183
    %v1544 = vpack.c.b16 %v1190, %v1184
    %v1545 = vpack.c.b16 %v1191, %v1185
    %v1546 = vpack.c.b16 %v1192, %v1186
    %v1547 = vpack.c.b16 %v1193, %v1187
    %v1548 = vpack.c.b16 %v1200, %v1194
    %v1549 = vpack.c.b16 %v1201, %v1195
    %v1550 = vpack.c.b16 %v1202, %v1196
    %v1551 = vpack.c.b16 %v1203, %v1197
    %v1552 = vpack.c.b16 %v1204, %v1198
    %v1553 = vpack.c.b16 %v1205, %v1199
    %v1554 = vpack.c.b16 %v1212, %v1206
    %v1555 = vpack.c.b16 %v1213, %v1207
    %v1556 = vpack.c.b16 %v1214, %v1208
    %v1557 = vpack.c.b16 %v1215, %v1209
    %v1558 = vpack.c.b16 %v1216, %v1210
    %v1559 = vpack.c.b16 %v1217, %v1211
    %v1560 = vpack.c.b16 %v1224, %v1218
    %v1561 = vpack.c.b16 %v1225, %v1219
    %v1562 = vpack.c.b16 %v1226, %v1220
    %v1563 = vpack.c.b16 %v1227, %v1221
    %v1564 = vpack.c.b16 %v1228, %v1222
    %v1565 = vpack.c.b16 %v1229, %v1223
    %v1566 = vpack.c.b16 %v1236, %v1230
    %v1567 = vpack.c.b16 %v1237, %v1231
    %v1568 = vpack.c.b16 %v1238, %v1232
    %v1569 = vpack.c.b16 %v1239, %v1233
    %v1570 = vpack.c.b16 %v1240, %v1234
    %v1571 = vpack.c.b16 %v1241, %v1235
    %v1572 = vpack.c.b16 %v1248, %v1242
    %v1573 = vpack.c.b16 %v1249, %v1243
    %v1574 = vpack.c.b16 %v1250, %v1244
    %v1575 = vpack.c.b16 %v1251, %v1245
    %v1576 = vpack.c.b16 %v1252, %v1246
    %v1577 = vpack.c.b16 %v1253, %v1247
    %v1578 = vpack.c.b16 %v1260, %v1254
    %v1579 = vpack.c.b16 %v1261, %v1255
    %v1580 = vpack.c.b16 %v1262, %v1256
    %v1581 = vpack.c.b16 %v1263, %v1257
    %v1582 = vpack.c.b16 %v1264, %v1258
    %v1583 = vpack.c.b16 %v1265, %v1259
    %v1584 = vpack.c.b16 %v1272, %v1266
    %v1585 = vpack.c.b16 %v1273, %v1267
    %v1586 = vpack.c.b16 %v1274, %v1268
    %v1587 = vpack.c.b16 %v1275, %v1269
    %v1588 = vpack.c.b16 %v1276, %v1270
    %v1589 = vpack.c.b16 %v1277, %v1271
    %v1590 = vpack.c.b16 %v1284, %v1278
    %v1591 = vpack.c.b16 %v1285, %v1279
    %v1592 = vpack.c.b16 %v1286, %v1280
    %v1593 = vpack.c.b16 %v1287, %v1281
    %v1594 = vpack.c.b16 %v1288, %v1282
    %v1595 = vpack.c.b16 %v1289, %v1283
    %v1596 = vpack.c.b16 %v1296, %v1290
    %v1597 = vpack.c.b16 %v1297, %v1291
    %v1598 = vpack.c.b16 %v1298, %v1292
    %v1599 = vpack.c.b16 %v1299, %v1293
    %v1600 = vpack.c.b16 %v1300, %v1294
    %v1601 = vpack.c.b16 %v1301, %v1295
    %v1602 = vpack.c.b16 %v1308, %v1302
    %v1603 = vpack.c.b16 %v1309, %v1303
    %v1604 = vpack.c.b16 %v1310, %v1304
    %v1605 = vpack.c.b16 %v1311, %v1305
    %v1606 = vpack.c.b16 %v1312, %v1306
    %v1607 = vpack.c.b16 %v1313, %v1307
    %v1608 = vpack.c.b16 %v1320, %v1314
    %v1609 = vpack.c.b16 %v1321, %v1315
    %v1610 = vpack.c.b16 %v1322, %v1316
    %v1611 = vpack.c.b16 %v1323, %v1317
    %v1612 = vpack.c.b16 %v1324, %v1318
    %v1613 = vpack.c.b16 %v1325, %v1319
    %1902 = vmatpush.bf16.msra.mxu0 %v1368
    %1903 = vmatpush.bf16.msra.mxu0 %v1362
    %1904 = vmatpush.bf16.msra.mxu0 %v1356
    %1905 = vmatpush.bf16.msra.mxu0 %v1350
    %1906 = vmatpush.bf16.msra.mxu0 %v1344
    %1907 = vmatpush.bf16.msra.mxu0 %v1338
    %1908 = vmatpush.bf16.msra.mxu0 %v1332
    %1909 = vmatpush.bf16.msra.mxu0 %v1326
    %1910 = vmatmul.bf16.gmra.mxu0 %v450
    %v1911 = vpop.f32.mrf.mxu0
    %v1912 = vadd.f32 %v436, %v1911
    %v1913 = vpop.f32.mrf.mxu0
    %1914 = vdwg.mxu0
    %1915 = vmatpush.bf16.msra.mxu0 %v1416
    %1916 = vmatpush.bf16.msra.mxu0 %v1410
    %1917 = vmatpush.bf16.msra.mxu0 %v1404
    %1918 = vmatpush.bf16.msra.mxu0 %v1398
    %1919 = vmatpush.bf16.msra.mxu0 %v1392
    %1920 = vmatpush.bf16.msra.mxu0 %v1386
    %1921 = vmatpush.bf16.msra.mxu0 %v1380
    %1922 = vmatpush.bf16.msra.mxu0 %v1374
    %1923 = vmatmul.bf16.gmra.mxu0 %v451
    %v1924 = vpop.f32.mrf.mxu0
    %v1925 = vadd.f32 %v1912, %v1924
    %v1926 = vpop.f32.mrf.mxu0
    %1927 = vdwg.mxu0
    %1928 = vmatpush.bf16.msra.mxu0 %v1464
    %1929 = vmatpush.bf16.msra.mxu0 %v1458
    %1930 = vmatpush.bf16.msra.mxu0 %v1452
    %1931 = vmatpush.bf16.msra.mxu0 %v1446
    %1932 = vmatpush.bf16.msra.mxu0 %v1440
    %1933 = vmatpush.bf16.msra.mxu0 %v1434
    %1934 = vmatpush.bf16.msra.mxu0 %v1428
    %1935 = vmatpush.bf16.msra.mxu0 %v1422
    %1936 = vmatmul.bf16.gmra.mxu0 %v452
    %v1937 = vpop.f32.mrf.mxu0
    %v1938 = vadd.f32 %v1925, %v1937
    %v1939 = vpop.f32.mrf.mxu0
    %1940 = vdwg.mxu0
    %1941 = vmatpush.bf16.msra.mxu0 %v1512
    %1942 = vmatpush.bf16.msra.mxu0 %v1506
    %1943 = vmatpush.bf16.msra.mxu0 %v1500
    %1944 = vmatpush.bf16.msra.mxu0 %v1494
    %1945 = vmatpush.bf16.msra.mxu0 %v1488
    %1946 = vmatpush.bf16.msra.mxu0 %v1482
    %1947 = vmatpush.bf16.msra.mxu0 %v1476
    %1948 = vmatpush.bf16.msra.mxu0 %v1470
    %1949 = vmatmul.bf16.gmra.mxu0 %v453
    %v1950 = vpop.f32.mrf.mxu0
    %v1951 = vadd.f32 %v1938, %v1950
    %v1952 = vpop.f32.mrf.mxu0
    %1953 = vdwg.mxu0
    %1954 = vmatpush.bf16.msra.mxu0 %v1560
    %1955 = vmatpush.bf16.msra.mxu0 %v1554
    %1956 = vmatpush.bf16.msra.mxu0 %v1548
    %1957 = vmatpush.bf16.msra.mxu0 %v1542
    %1958 = vmatpush.bf16.msra.mxu0 %v1536
    %1959 = vmatpush.bf16.msra.mxu0 %v1530
    %1960 = vmatpush.bf16.msra.mxu0 %v1524
    %1961 = vmatpush.bf16.msra.mxu0 %v1518
    %1962 = vmatmul.bf16.gmra.mxu0 %v454
    %v1963 = vpop.f32.mrf.mxu0
    %v1964 = vadd.f32 %v1951, %v1963
    %v1965 = vpop.f32.mrf.mxu0
    %1966 = vdwg.mxu0
    %1967 = vmatpush.bf16.msra.mxu0 %v1608
    %1968 = vmatpush.bf16.msra.mxu0 %v1602
    %1969 = vmatpush.bf16.msra.mxu0 %v1596
    %1970 = vmatpush.bf16.msra.mxu0 %v1590
    %1971 = vmatpush.bf16.msra.mxu0 %v1584
    %1972 = vmatpush.bf16.msra.mxu0 %v1578
    %1973 = vmatpush.bf16.msra.mxu0 %v1572
    %1974 = vmatpush.bf16.msra.mxu0 %v1566
    %1975 = vmatmul.bf16.gmra.mxu0 %v455
    %v1976 = vpop.f32.mrf.mxu0
    %v1977 = vadd.f32 %v1964, %v1976
    %v1978 = vpop.f32.mrf.mxu0
    %1979 = vdwg.mxu0
    %1980 = vmatpush.bf16.msra.mxu0 %v1369
    %1981 = vmatpush.bf16.msra.mxu0 %v1363
    %1982 = vmatpush.bf16.msra.mxu0 %v1357
    %1983 = vmatpush.bf16.msra.mxu0 %v1351
    %1984 = vmatpush.bf16.msra.mxu0 %v1345
    %1985 = vmatpush.bf16.msra.mxu0 %v1339
    %1986 = vmatpush.bf16.msra.mxu0 %v1333
    %1987 = vmatpush.bf16.msra.mxu0 %v1327
    %1988 = vmatmul.bf16.gmra.mxu0 %v450
    %v1989 = vpop.f32.mrf.mxu0
    %v1990 = vadd.f32 %v437, %v1989
    %v1991 = vpop.f32.mrf.mxu0
    %1992 = vdwg.mxu0
    %1993 = vmatpush.bf16.msra.mxu0 %v1417
    %1994 = vmatpush.bf16.msra.mxu0 %v1411
    %1995 = vmatpush.bf16.msra.mxu0 %v1405
    %1996 = vmatpush.bf16.msra.mxu0 %v1399
    %1997 = vmatpush.bf16.msra.mxu0 %v1393
    %1998 = vmatpush.bf16.msra.mxu0 %v1387
    %1999 = vmatpush.bf16.msra.mxu0 %v1381
    %2000 = vmatpush.bf16.msra.mxu0 %v1375
    %2001 = vmatmul.bf16.gmra.mxu0 %v451
    %v2002 = vpop.f32.mrf.mxu0
    %v2003 = vadd.f32 %v1990, %v2002
    %v2004 = vpop.f32.mrf.mxu0
    %2005 = vdwg.mxu0
    %2006 = vmatpush.bf16.msra.mxu0 %v1465
    %2007 = vmatpush.bf16.msra.mxu0 %v1459
    %2008 = vmatpush.bf16.msra.mxu0 %v1453
    %2009 = vmatpush.bf16.msra.mxu0 %v1447
    %2010 = vmatpush.bf16.msra.mxu0 %v1441
    %2011 = vmatpush.bf16.msra.mxu0 %v1435
    %2012 = vmatpush.bf16.msra.mxu0 %v1429
    %2013 = vmatpush.bf16.msra.mxu0 %v1423
    %2014 = vmatmul.bf16.gmra.mxu0 %v452
    %v2015 = vpop.f32.mrf.mxu0
    %v2016 = vadd.f32 %v2003, %v2015
    %v2017 = vpop.f32.mrf.mxu0
    %2018 = vdwg.mxu0
    %2019 = vmatpush.bf16.msra.mxu0 %v1513
    %2020 = vmatpush.bf16.msra.mxu0 %v1507
    %2021 = vmatpush.bf16.msra.mxu0 %v1501
    %2022 = vmatpush.bf16.msra.mxu0 %v1495
    %2023 = vmatpush.bf16.msra.mxu0 %v1489
    %2024 = vmatpush.bf16.msra.mxu0 %v1483
    %2025 = vmatpush.bf16.msra.mxu0 %v1477
    %2026 = vmatpush.bf16.msra.mxu0 %v1471
    %2027 = vmatmul.bf16.gmra.mxu0 %v453
    %v2028 = vpop.f32.mrf.mxu0
    %v2029 = vadd.f32 %v2016, %v2028
    %v2030 = vpop.f32.mrf.mxu0
    %2031 = vdwg.mxu0
    %2032 = vmatpush.bf16.msra.mxu0 %v1561
    %2033 = vmatpush.bf16.msra.mxu0 %v1555
    %2034 = vmatpush.bf16.msra.mxu0 %v1549
    %2035 = vmatpush.bf16.msra.mxu0 %v1543
    %2036 = vmatpush.bf16.msra.mxu0 %v1537
    %2037 = vmatpush.bf16.msra.mxu0 %v1531
    %2038 = vmatpush.bf16.msra.mxu0 %v1525
    %2039 = vmatpush.bf16.msra.mxu0 %v1519
    %2040 = vmatmul.bf16.gmra.mxu0 %v454
    %v2041 = vpop.f32.mrf.mxu0
    %v2042 = vadd.f32 %v2029, %v2041
    %v2043 = vpop.f32.mrf.mxu0
    %2044 = vdwg.mxu0
    %2045 = vmatpush.bf16.msra.mxu0 %v1609
    %2046 = vmatpush.bf16.msra.mxu0 %v1603
    %2047 = vmatpush.bf16.msra.mxu0 %v1597
    %2048 = vmatpush.bf16.msra.mxu0 %v1591
    %2049 = vmatpush.bf16.msra.mxu0 %v1585
    %2050 = vmatpush.bf16.msra.mxu0 %v1579
    %2051 = vmatpush.bf16.msra.mxu0 %v1573
    %2052 = vmatpush.bf16.msra.mxu0 %v1567
    %2053 = vmatmul.bf16.gmra.mxu0 %v455
    %v2054 = vpop.f32.mrf.mxu0
    %v2055 = vadd.f32 %v2042, %v2054
    %v2056 = vpop.f32.mrf.mxu0
    %2057 = vdwg.mxu0
    %2058 = vmatpush.bf16.msra.mxu0 %v1370
    %2059 = vmatpush.bf16.msra.mxu0 %v1364
    %2060 = vmatpush.bf16.msra.mxu0 %v1358
    %2061 = vmatpush.bf16.msra.mxu0 %v1352
    %2062 = vmatpush.bf16.msra.mxu0 %v1346
    %2063 = vmatpush.bf16.msra.mxu0 %v1340
    %2064 = vmatpush.bf16.msra.mxu0 %v1334
    %2065 = vmatpush.bf16.msra.mxu0 %v1328
    %2066 = vmatmul.bf16.gmra.mxu0 %v450
    %v2067 = vpop.f32.mrf.mxu0
    %v2068 = vadd.f32 %v438, %v2067
    %v2069 = vpop.f32.mrf.mxu0
    %2070 = vdwg.mxu0
    %2071 = vmatpush.bf16.msra.mxu0 %v1418
    %2072 = vmatpush.bf16.msra.mxu0 %v1412
    %2073 = vmatpush.bf16.msra.mxu0 %v1406
    %2074 = vmatpush.bf16.msra.mxu0 %v1400
    %2075 = vmatpush.bf16.msra.mxu0 %v1394
    %2076 = vmatpush.bf16.msra.mxu0 %v1388
    %2077 = vmatpush.bf16.msra.mxu0 %v1382
    %2078 = vmatpush.bf16.msra.mxu0 %v1376
    %2079 = vmatmul.bf16.gmra.mxu0 %v451
    %v2080 = vpop.f32.mrf.mxu0
    %v2081 = vadd.f32 %v2068, %v2080
    %v2082 = vpop.f32.mrf.mxu0
    %2083 = vdwg.mxu0
    %2084 = vmatpush.bf16.msra.mxu0 %v1466
    %2085 = vmatpush.bf16.msra.mxu0 %v1460
    %2086 = vmatpush.bf16.msra.mxu0 %v1454
    %2087 = vmatpush.bf16.msra.mxu0 %v1448
    %2088 = vmatpush.bf16.msra.mxu0 %v1442
    %2089 = vmatpush.bf16.msra.mxu0 %v1436
    %2090 = vmatpush.bf16.msra.mxu0 %v1430
    %2091 = vmatpush.bf16.msra.mxu0 %v1424
    %2092 = vmatmul.bf16.gmra.mxu0 %v452
    %v2093 = vpop.f32.mrf.mxu0
    %v2094 = vadd.f32 %v2081, %v2093
    %v2095 = vpop.f32.mrf.mxu0
    %2096 = vdwg.mxu0
    %2097 = vmatpush.bf16.msra.mxu0 %v1514
    %2098 = vmatpush.bf16.msra.mxu0 %v1508
    %2099 = vmatpush.bf16.msra.mxu0 %v1502
    %2100 = vmatpush.bf16.msra.mxu0 %v1496
    %2101 = vmatpush.bf16.msra.mxu0 %v1490
    %2102 = vmatpush.bf16.msra.mxu0 %v1484
    %2103 = vmatpush.bf16.msra.mxu0 %v1478
    %2104 = vmatpush.bf16.msra.mxu0 %v1472
    %2105 = vmatmul.bf16.gmra.mxu0 %v453
    %v2106 = vpop.f32.mrf.mxu0
    %v2107 = vadd.f32 %v2094, %v2106
    %v2108 = vpop.f32.mrf.mxu0
    %2109 = vdwg.mxu0
    %2110 = vmatpush.bf16.msra.mxu0 %v1562
    %2111 = vmatpush.bf16.msra.mxu0 %v1556
    %2112 = vmatpush.bf16.msra.mxu0 %v1550
    %2113 = vmatpush.bf16.msra.mxu0 %v1544
    %2114 = vmatpush.bf16.msra.mxu0 %v1538
    %2115 = vmatpush.bf16.msra.mxu0 %v1532
    %2116 = vmatpush.bf16.msra.mxu0 %v1526
    %2117 = vmatpush.bf16.msra.mxu0 %v1520
    %2118 = vmatmul.bf16.gmra.mxu0 %v454
    %v2119 = vpop.f32.mrf.mxu0
    %v2120 = vadd.f32 %v2107, %v2119
    %v2121 = vpop.f32.mrf.mxu0
    %2122 = vdwg.mxu0
    %2123 = vmatpush.bf16.msra.mxu0 %v1610
    %2124 = vmatpush.bf16.msra.mxu0 %v1604
    %2125 = vmatpush.bf16.msra.mxu0 %v1598
    %2126 = vmatpush.bf16.msra.mxu0 %v1592
    %2127 = vmatpush.bf16.msra.mxu0 %v1586
    %2128 = vmatpush.bf16.msra.mxu0 %v1580
    %2129 = vmatpush.bf16.msra.mxu0 %v1574
    %2130 = vmatpush.bf16.msra.mxu0 %v1568
    %2131 = vmatmul.bf16.gmra.mxu0 %v455
    %v2132 = vpop.f32.mrf.mxu0
    %v2133 = vadd.f32 %v2120, %v2132
    %v2134 = vpop.f32.mrf.mxu0
    %2135 = vdwg.mxu0
    %2136 = vmatpush.bf16.msra.mxu0 %v1371
    %2137 = vmatpush.bf16.msra.mxu0 %v1365
    %2138 = vmatpush.bf16.msra.mxu0 %v1359
    %2139 = vmatpush.bf16.msra.mxu0 %v1353
    %2140 = vmatpush.bf16.msra.mxu0 %v1347
    %2141 = vmatpush.bf16.msra.mxu0 %v1341
    %2142 = vmatpush.bf16.msra.mxu0 %v1335
    %2143 = vmatpush.bf16.msra.mxu0 %v1329
    %2144 = vmatmul.bf16.gmra.mxu0 %v450
    %v2145 = vpop.f32.mrf.mxu0
    %v2146 = vadd.f32 %v439, %v2145
    %v2147 = vpop.f32.mrf.mxu0
    %2148 = vdwg.mxu0
    %2149 = vmatpush.bf16.msra.mxu0 %v1419
    %2150 = vmatpush.bf16.msra.mxu0 %v1413
    %2151 = vmatpush.bf16.msra.mxu0 %v1407
    %2152 = vmatpush.bf16.msra.mxu0 %v1401
    %2153 = vmatpush.bf16.msra.mxu0 %v1395
    %2154 = vmatpush.bf16.msra.mxu0 %v1389
    %2155 = vmatpush.bf16.msra.mxu0 %v1383
    %2156 = vmatpush.bf16.msra.mxu0 %v1377
    %2157 = vmatmul.bf16.gmra.mxu0 %v451
    %v2158 = vpop.f32.mrf.mxu0
    %v2159 = vadd.f32 %v2146, %v2158
    %v2160 = vpop.f32.mrf.mxu0
    %2161 = vdwg.mxu0
    %2162 = vmatpush.bf16.msra.mxu0 %v1467
    %2163 = vmatpush.bf16.msra.mxu0 %v1461
    %2164 = vmatpush.bf16.msra.mxu0 %v1455
    %2165 = vmatpush.bf16.msra.mxu0 %v1449
    %2166 = vmatpush.bf16.msra.mxu0 %v1443
    %2167 = vmatpush.bf16.msra.mxu0 %v1437
    %2168 = vmatpush.bf16.msra.mxu0 %v1431
    %2169 = vmatpush.bf16.msra.mxu0 %v1425
    %2170 = vmatmul.bf16.gmra.mxu0 %v452
    %v2171 = vpop.f32.mrf.mxu0
    %v2172 = vadd.f32 %v2159, %v2171
    %v2173 = vpop.f32.mrf.mxu0
    %2174 = vdwg.mxu0
    %2175 = vmatpush.bf16.msra.mxu0 %v1515
    %2176 = vmatpush.bf16.msra.mxu0 %v1509
    %2177 = vmatpush.bf16.msra.mxu0 %v1503
    %2178 = vmatpush.bf16.msra.mxu0 %v1497
    %2179 = vmatpush.bf16.msra.mxu0 %v1491
    %2180 = vmatpush.bf16.msra.mxu0 %v1485
    %2181 = vmatpush.bf16.msra.mxu0 %v1479
    %2182 = vmatpush.bf16.msra.mxu0 %v1473
    %2183 = vmatmul.bf16.gmra.mxu0 %v453
    %v2184 = vpop.f32.mrf.mxu0
    %v2185 = vadd.f32 %v2172, %v2184
    %v2186 = vpop.f32.mrf.mxu0
    %2187 = vdwg.mxu0
    %2188 = vmatpush.bf16.msra.mxu0 %v1563
    %2189 = vmatpush.bf16.msra.mxu0 %v1557
    %2190 = vmatpush.bf16.msra.mxu0 %v1551
    %2191 = vmatpush.bf16.msra.mxu0 %v1545
    %2192 = vmatpush.bf16.msra.mxu0 %v1539
    %2193 = vmatpush.bf16.msra.mxu0 %v1533
    %2194 = vmatpush.bf16.msra.mxu0 %v1527
    %2195 = vmatpush.bf16.msra.mxu0 %v1521
    %2196 = vmatmul.bf16.gmra.mxu0 %v454
    %v2197 = vpop.f32.mrf.mxu0
    %v2198 = vadd.f32 %v2185, %v2197
    %v2199 = vpop.f32.mrf.mxu0
    %2200 = vdwg.mxu0
    %2201 = vmatpush.bf16.msra.mxu0 %v1611
    %2202 = vmatpush.bf16.msra.mxu0 %v1605
    %2203 = vmatpush.bf16.msra.mxu0 %v1599
    %2204 = vmatpush.bf16.msra.mxu0 %v1593
    %2205 = vmatpush.bf16.msra.mxu0 %v1587
    %2206 = vmatpush.bf16.msra.mxu0 %v1581
    %2207 = vmatpush.bf16.msra.mxu0 %v1575
    %2208 = vmatpush.bf16.msra.mxu0 %v1569
    %2209 = vmatmul.bf16.gmra.mxu0 %v455
    %v2210 = vpop.f32.mrf.mxu0
    %v2211 = vadd.f32 %v2198, %v2210
    %v2212 = vpop.f32.mrf.mxu0
    %2213 = vdwg.mxu0
    %2214 = vmatpush.bf16.msra.mxu0 %v1372
    %2215 = vmatpush.bf16.msra.mxu0 %v1366
    %2216 = vmatpush.bf16.msra.mxu0 %v1360
    %2217 = vmatpush.bf16.msra.mxu0 %v1354
    %2218 = vmatpush.bf16.msra.mxu0 %v1348
    %2219 = vmatpush.bf16.msra.mxu0 %v1342
    %2220 = vmatpush.bf16.msra.mxu0 %v1336
    %2221 = vmatpush.bf16.msra.mxu0 %v1330
    %2222 = vmatmul.bf16.gmra.mxu0 %v450
    %v2223 = vpop.f32.mrf.mxu0
    %v2224 = vadd.f32 %v440, %v2223
    %v2225 = vpop.f32.mrf.mxu0
    %2226 = vdwg.mxu0
    %2227 = vmatpush.bf16.msra.mxu0 %v1420
    %2228 = vmatpush.bf16.msra.mxu0 %v1414
    %2229 = vmatpush.bf16.msra.mxu0 %v1408
    %2230 = vmatpush.bf16.msra.mxu0 %v1402
    %2231 = vmatpush.bf16.msra.mxu0 %v1396
    %2232 = vmatpush.bf16.msra.mxu0 %v1390
    %2233 = vmatpush.bf16.msra.mxu0 %v1384
    %2234 = vmatpush.bf16.msra.mxu0 %v1378
    %2235 = vmatmul.bf16.gmra.mxu0 %v451
    %v2236 = vpop.f32.mrf.mxu0
    %v2237 = vadd.f32 %v2224, %v2236
    %v2238 = vpop.f32.mrf.mxu0
    %2239 = vdwg.mxu0
    %2240 = vmatpush.bf16.msra.mxu0 %v1468
    %2241 = vmatpush.bf16.msra.mxu0 %v1462
    %2242 = vmatpush.bf16.msra.mxu0 %v1456
    %2243 = vmatpush.bf16.msra.mxu0 %v1450
    %2244 = vmatpush.bf16.msra.mxu0 %v1444
    %2245 = vmatpush.bf16.msra.mxu0 %v1438
    %2246 = vmatpush.bf16.msra.mxu0 %v1432
    %2247 = vmatpush.bf16.msra.mxu0 %v1426
    %2248 = vmatmul.bf16.gmra.mxu0 %v452
    %v2249 = vpop.f32.mrf.mxu0
    %v2250 = vadd.f32 %v2237, %v2249
    %v2251 = vpop.f32.mrf.mxu0
    %2252 = vdwg.mxu0
    %2253 = vmatpush.bf16.msra.mxu0 %v1516
    %2254 = vmatpush.bf16.msra.mxu0 %v1510
    %2255 = vmatpush.bf16.msra.mxu0 %v1504
    %2256 = vmatpush.bf16.msra.mxu0 %v1498
    %2257 = vmatpush.bf16.msra.mxu0 %v1492
    %2258 = vmatpush.bf16.msra.mxu0 %v1486
    %2259 = vmatpush.bf16.msra.mxu0 %v1480
    %2260 = vmatpush.bf16.msra.mxu0 %v1474
    %2261 = vmatmul.bf16.gmra.mxu0 %v453
    %v2262 = vpop.f32.mrf.mxu0
    %v2263 = vadd.f32 %v2250, %v2262
    %v2264 = vpop.f32.mrf.mxu0
    %2265 = vdwg.mxu0
    %2266 = vmatpush.bf16.msra.mxu0 %v1564
    %2267 = vmatpush.bf16.msra.mxu0 %v1558
    %2268 = vmatpush.bf16.msra.mxu0 %v1552
    %2269 = vmatpush.bf16.msra.mxu0 %v1546
    %2270 = vmatpush.bf16.msra.mxu0 %v1540
    %2271 = vmatpush.bf16.msra.mxu0 %v1534
    %2272 = vmatpush.bf16.msra.mxu0 %v1528
    %2273 = vmatpush.bf16.msra.mxu0 %v1522
    %2274 = vmatmul.bf16.gmra.mxu0 %v454
    %v2275 = vpop.f32.mrf.mxu0
    %v2276 = vadd.f32 %v2263, %v2275
    %v2277 = vpop.f32.mrf.mxu0
    %2278 = vdwg.mxu0
    %2279 = vmatpush.bf16.msra.mxu0 %v1612
    %2280 = vmatpush.bf16.msra.mxu0 %v1606
    %2281 = vmatpush.bf16.msra.mxu0 %v1600
    %2282 = vmatpush.bf16.msra.mxu0 %v1594
    %2283 = vmatpush.bf16.msra.mxu0 %v1588
    %2284 = vmatpush.bf16.msra.mxu0 %v1582
    %2285 = vmatpush.bf16.msra.mxu0 %v1576
    %2286 = vmatpush.bf16.msra.mxu0 %v1570
    %2287 = vmatmul.bf16.gmra.mxu0 %v455
    %v2288 = vpop.f32.mrf.mxu0
    %v2289 = vadd.f32 %v2276, %v2288
    %v2290 = vpop.f32.mrf.mxu0
    %2291 = vdwg.mxu0
    %2292 = vmatpush.bf16.msra.mxu0 %v1373
    %2293 = vmatpush.bf16.msra.mxu0 %v1367
    %2294 = vmatpush.bf16.msra.mxu0 %v1361
    %2295 = vmatpush.bf16.msra.mxu0 %v1355
    %2296 = vmatpush.bf16.msra.mxu0 %v1349
    %2297 = vmatpush.bf16.msra.mxu0 %v1343
    %2298 = vmatpush.bf16.msra.mxu0 %v1337
    %2299 = vmatpush.bf16.msra.mxu0 %v1331
    %2300 = vmatmul.bf16.gmra.mxu0 %v450
    %v2301 = vpop.f32.mrf.mxu0
    %v2302 = vadd.f32 %v441, %v2301
    %v2303 = vpop.f32.mrf.mxu0
    %2304 = vdwg.mxu0
    %2305 = vmatpush.bf16.msra.mxu0 %v1421
    %2306 = vmatpush.bf16.msra.mxu0 %v1415
    %2307 = vmatpush.bf16.msra.mxu0 %v1409
    %2308 = vmatpush.bf16.msra.mxu0 %v1403
    %2309 = vmatpush.bf16.msra.mxu0 %v1397
    %2310 = vmatpush.bf16.msra.mxu0 %v1391
    %2311 = vmatpush.bf16.msra.mxu0 %v1385
    %2312 = vmatpush.bf16.msra.mxu0 %v1379
    %2313 = vmatmul.bf16.gmra.mxu0 %v451
    %v2314 = vpop.f32.mrf.mxu0
    %v2315 = vadd.f32 %v2302, %v2314
    %v2316 = vpop.f32.mrf.mxu0
    %2317 = vdwg.mxu0
    %2318 = vmatpush.bf16.msra.mxu0 %v1469
    %2319 = vmatpush.bf16.msra.mxu0 %v1463
    %2320 = vmatpush.bf16.msra.mxu0 %v1457
    %2321 = vmatpush.bf16.msra.mxu0 %v1451
    %2322 = vmatpush.bf16.msra.mxu0 %v1445
    %2323 = vmatpush.bf16.msra.mxu0 %v1439
    %2324 = vmatpush.bf16.msra.mxu0 %v1433
    %2325 = vmatpush.bf16.msra.mxu0 %v1427
    %2326 = vmatmul.bf16.gmra.mxu0 %v452
    %v2327 = vpop.f32.mrf.mxu0
    %v2328 = vadd.f32 %v2315, %v2327
    %v2329 = vpop.f32.mrf.mxu0
    %2330 = vdwg.mxu0
    %2331 = vmatpush.bf16.msra.mxu0 %v1517
    %2332 = vmatpush.bf16.msra.mxu0 %v1511
    %2333 = vmatpush.bf16.msra.mxu0 %v1505
    %2334 = vmatpush.bf16.msra.mxu0 %v1499
    %2335 = vmatpush.bf16.msra.mxu0 %v1493
    %2336 = vmatpush.bf16.msra.mxu0 %v1487
    %2337 = vmatpush.bf16.msra.mxu0 %v1481
    %2338 = vmatpush.bf16.msra.mxu0 %v1475
    %2339 = vmatmul.bf16.gmra.mxu0 %v453
    %v2340 = vpop.f32.mrf.mxu0
    %v2341 = vadd.f32 %v2328, %v2340
    %v2342 = vpop.f32.mrf.mxu0
    %2343 = vdwg.mxu0
    %2344 = vmatpush.bf16.msra.mxu0 %v1565
    %2345 = vmatpush.bf16.msra.mxu0 %v1559
    %2346 = vmatpush.bf16.msra.mxu0 %v1553
    %2347 = vmatpush.bf16.msra.mxu0 %v1547
    %2348 = vmatpush.bf16.msra.mxu0 %v1541
    %2349 = vmatpush.bf16.msra.mxu0 %v1535
    %2350 = vmatpush.bf16.msra.mxu0 %v1529
    %2351 = vmatpush.bf16.msra.mxu0 %v1523
    %2352 = vmatmul.bf16.gmra.mxu0 %v454
    %v2353 = vpop.f32.mrf.mxu0
    %v2354 = vadd.f32 %v2341, %v2353
    %v2355 = vpop.f32.mrf.mxu0
    %2356 = vdwg.mxu0
    %2357 = vmatpush.bf16.msra.mxu0 %v1613
    %2358 = vmatpush.bf16.msra.mxu0 %v1607
    %2359 = vmatpush.bf16.msra.mxu0 %v1601
    %2360 = vmatpush.bf16.msra.mxu0 %v1595
    %2361 = vmatpush.bf16.msra.mxu0 %v1589
    %2362 = vmatpush.bf16.msra.mxu0 %v1583
    %2363 = vmatpush.bf16.msra.mxu0 %v1577
    %2364 = vmatpush.bf16.msra.mxu0 %v1571
    %2365 = vmatmul.bf16.gmra.mxu0 %v455
    %v2366 = vpop.f32.mrf.mxu0
    %v2367 = vadd.f32 %v2354, %v2366
    %v2368 = vpop.f32.mrf.mxu0
    %2369 = vdwg.mxu0
    %v2370 = vtanh.pop %v1977
    %v2371 = vtanh.pop %v2055
    %v2372 = vtanh.pop %v2133
    %v2373 = vtanh.pop %v2211
    %v2374 = vtanh.pop %v2289
    %v2375 = vtanh.pop %v2367
    %v2376 = vpack.c.bf16 %v2370, %v2370
    %v2377 = vpack.c.bf16 %v2371, %v2371
    %v2378 = vpack.c.bf16 %v2372, %v2372
    %v2379 = vpack.c.bf16 %v2373, %v2373
    %v2380 = vpack.c.bf16 %v2374, %v2374
    %v2381 = vpack.c.bf16 %v2375, %v2375
    %v2382 = vld [vmem:[#allocation10] sm:$0xff]
    %v2383 = vld [vmem:[#allocation10 + $0x8] sm:$0xff]
    %v2384 = vld [vmem:[#allocation10 + $0x10] sm:$0xff]
    %v2385 = vld [vmem:[#allocation10 + $0x18] sm:$0xff]
    %v2386 = vld [vmem:[#allocation10 + $0x20] sm:$0xff]
    %v2387 = vld [vmem:[#allocation10 + $0x28] sm:$0xff]
    %v2388 = vld [vmem:[#allocation10 + $0x30] sm:$0xff]
    %v2389 = vld [vmem:[#allocation10 + $0x38] sm:$0xff]
    %v2390 = vld [vmem:[#allocation10 + $0x40] sm:$0xff]
    %v2391 = vld [vmem:[#allocation10 + $0x48] sm:$0xff]
    %v2392 = vld [vmem:[#allocation10 + $0x50] sm:$0xff]
    %v2393 = vld [vmem:[#allocation10 + $0x58] sm:$0xff]
    %v2394 = vld [vmem:[#allocation10 + $0x60] sm:$0xff]
    %v2395 = vld [vmem:[#allocation10 + $0x68] sm:$0xff]
    %v2396 = vld [vmem:[#allocation10 + $0x70] sm:$0xff]
    %v2397 = vld [vmem:[#allocation10 + $0x78] sm:$0xff]
    %v2398 = vld [vmem:[#allocation10 + $0x80] sm:$0xff]
    %v2399 = vld [vmem:[#allocation10 + $0x88] sm:$0xff]
    %v2400 = vld [vmem:[#allocation10 + $0x90] sm:$0xff]
    %v2401 = vld [vmem:[#allocation10 + $0x98] sm:$0xff]
    %v2402 = vld [vmem:[#allocation10 + $0xa0] sm:$0xff]
    %v2403 = vld [vmem:[#allocation10 + $0xa8] sm:$0xff]
    %v2404 = vld [vmem:[#allocation10 + $0xb0] sm:$0xff]
    %v2405 = vld [vmem:[#allocation10 + $0xb8] sm:$0xff]
    %v2406 = vld [vmem:[#allocation10 + $0xc0] sm:$0xff]
    %v2407 = vld [vmem:[#allocation10 + $0xc8] sm:$0xff]
    %v2408 = vld [vmem:[#allocation10 + $0xd0] sm:$0xff]
    %v2409 = vld [vmem:[#allocation10 + $0xd8] sm:$0xff]
    %v2410 = vld [vmem:[#allocation10 + $0xe0] sm:$0xff]
    %v2411 = vld [vmem:[#allocation10 + $0xe8] sm:$0xff]
    %v2412 = vld [vmem:[#allocation10 + $0xf0] sm:$0xff]
    %v2413 = vld [vmem:[#allocation10 + $0xf8] sm:$0xff]
    %v2414 = vld [vmem:[#allocation10 + $0x100] sm:$0xff]
    %v2415 = vld [vmem:[#allocation10 + $0x108] sm:$0xff]
    %v2416 = vld [vmem:[#allocation10 + $0x110] sm:$0xff]
    %v2417 = vld [vmem:[#allocation10 + $0x118] sm:$0xff]
    %v2418 = vld [vmem:[#allocation10 + $0x120] sm:$0xff]
    %v2419 = vld [vmem:[#allocation10 + $0x128] sm:$0xff]
    %v2420 = vld [vmem:[#allocation10 + $0x130] sm:$0xff]
    %v2421 = vld [vmem:[#allocation10 + $0x138] sm:$0xff]
    %v2422 = vld [vmem:[#allocation10 + $0x140] sm:$0xff]
    %v2423 = vld [vmem:[#allocation10 + $0x148] sm:$0xff]
    %v2424 = vld [vmem:[#allocation10 + $0x150] sm:$0xff]
    %v2425 = vld [vmem:[#allocation10 + $0x158] sm:$0xff]
    %v2426 = vld [vmem:[#allocation10 + $0x160] sm:$0xff]
    %v2427 = vld [vmem:[#allocation10 + $0x168] sm:$0xff]
    %v2428 = vld [vmem:[#allocation10 + $0x170] sm:$0xff]
    %v2429 = vld [vmem:[#allocation10 + $0x178] sm:$0xff]
    %v2430 = vld [vmem:[#allocation10 + $0x180] sm:$0xff]
    %v2431 = vld [vmem:[#allocation10 + $0x188] sm:$0xff]
    %v2432 = vld [vmem:[#allocation10 + $0x190] sm:$0xff]
    %v2433 = vld [vmem:[#allocation10 + $0x198] sm:$0xff]
    %v2434 = vld [vmem:[#allocation10 + $0x1a0] sm:$0xff]
    %v2435 = vld [vmem:[#allocation10 + $0x1a8] sm:$0xff]
    %v2436 = vld [vmem:[#allocation10 + $0x1b0] sm:$0xff]
    %v2437 = vld [vmem:[#allocation10 + $0x1b8] sm:$0xff]
    %v2438 = vld [vmem:[#allocation10 + $0x1c0] sm:$0xff]
    %v2439 = vld [vmem:[#allocation10 + $0x1c8] sm:$0xff]
    %v2440 = vld [vmem:[#allocation10 + $0x1d0] sm:$0xff]
    %v2441 = vld [vmem:[#allocation10 + $0x1d8] sm:$0xff]
    %v2442 = vld [vmem:[#allocation10 + $0x1e0] sm:$0xff]
    %v2443 = vld [vmem:[#allocation10 + $0x1e8] sm:$0xff]
    %v2444 = vld [vmem:[#allocation10 + $0x1f0] sm:$0xff]
    %v2445 = vld [vmem:[#allocation10 + $0x1f8] sm:$0xff]
    %v2446 = vld [vmem:[#allocation10 + $0x200] sm:$0xff]
    %v2447 = vld [vmem:[#allocation10 + $0x208] sm:$0xff]
    %v2448 = vld [vmem:[#allocation10 + $0x210] sm:$0xff]
    %v2449 = vld [vmem:[#allocation10 + $0x218] sm:$0xff]
    %v2450 = vld [vmem:[#allocation10 + $0x220] sm:$0xff]
    %v2451 = vld [vmem:[#allocation10 + $0x228] sm:$0xff]
    %v2452 = vld [vmem:[#allocation10 + $0x230] sm:$0xff]
    %v2453 = vld [vmem:[#allocation10 + $0x238] sm:$0xff]
    %v2454 = vld [vmem:[#allocation10 + $0x240] sm:$0xff]
    %v2455 = vld [vmem:[#allocation10 + $0x248] sm:$0xff]
    %v2456 = vld [vmem:[#allocation10 + $0x250] sm:$0xff]
    %v2457 = vld [vmem:[#allocation10 + $0x258] sm:$0xff]
    %v2458 = vld [vmem:[#allocation10 + $0x260] sm:$0xff]
    %v2459 = vld [vmem:[#allocation10 + $0x268] sm:$0xff]
    %v2460 = vld [vmem:[#allocation10 + $0x270] sm:$0xff]
    %v2461 = vld [vmem:[#allocation10 + $0x278] sm:$0xff]
    %v2462 = vld [vmem:[#allocation10 + $0x280] sm:$0xff]
    %v2463 = vld [vmem:[#allocation10 + $0x288] sm:$0xff]
    %v2464 = vld [vmem:[#allocation10 + $0x290] sm:$0xff]
    %v2465 = vld [vmem:[#allocation10 + $0x298] sm:$0xff]
    %v2466 = vld [vmem:[#allocation10 + $0x2a0] sm:$0xff]
    %v2467 = vld [vmem:[#allocation10 + $0x2a8] sm:$0xff]
    %v2468 = vld [vmem:[#allocation10 + $0x2b0] sm:$0xff]
    %v2469 = vld [vmem:[#allocation10 + $0x2b8] sm:$0xff]
    %v2470 = vld [vmem:[#allocation10 + $0x2c0] sm:$0xff]
    %v2471 = vld [vmem:[#allocation10 + $0x2c8] sm:$0xff]
    %v2472 = vld [vmem:[#allocation10 + $0x2d0] sm:$0xff]
    %v2473 = vld [vmem:[#allocation10 + $0x2d8] sm:$0xff]
    %v2474 = vld [vmem:[#allocation10 + $0x2e0] sm:$0xff]
    %v2475 = vld [vmem:[#allocation10 + $0x2e8] sm:$0xff]
    %v2476 = vld [vmem:[#allocation10 + $0x2f0] sm:$0xff]
    %v2477 = vld [vmem:[#allocation10 + $0x2f8] sm:$0xff]
    %v2478 = vld [vmem:[#allocation5] sm:$0x3]
    %v2479 = vunpack.c.l.bf16 %v2478
    %v2576 = vunpack.c.l.b16 %v2382
    %v2577 = vunpack.c.h.b16 %v2382
    %v2578 = vunpack.c.l.b16 %v2383
    %v2579 = vunpack.c.h.b16 %v2383
    %v2580 = vunpack.c.l.b16 %v2384
    %v2581 = vunpack.c.h.b16 %v2384
    %v2582 = vunpack.c.l.b16 %v2385
    %v2583 = vunpack.c.h.b16 %v2385
    %v2584 = vunpack.c.l.b16 %v2386
    %v2585 = vunpack.c.h.b16 %v2386
    %v2586 = vunpack.c.l.b16 %v2387
    %v2587 = vunpack.c.h.b16 %v2387
    %v2588 = vunpack.c.l.b16 %v2388
    %v2589 = vunpack.c.h.b16 %v2388
    %v2590 = vunpack.c.l.b16 %v2389
    %v2591 = vunpack.c.h.b16 %v2389
    %v2592 = vunpack.c.l.b16 %v2390
    %v2593 = vunpack.c.h.b16 %v2390
    %v2594 = vunpack.c.l.b16 %v2391
    %v2595 = vunpack.c.h.b16 %v2391
    %v2596 = vunpack.c.l.b16 %v2392
    %v2597 = vunpack.c.h.b16 %v2392
    %v2598 = vunpack.c.l.b16 %v2393
    %v2599 = vunpack.c.h.b16 %v2393
    %v2600 = vunpack.c.l.b16 %v2394
    %v2601 = vunpack.c.h.b16 %v2394
    %v2602 = vunpack.c.l.b16 %v2395
    %v2603 = vunpack.c.h.b16 %v2395
    %v2604 = vunpack.c.l.b16 %v2396
    %v2605 = vunpack.c.h.b16 %v2396
    %v2606 = vunpack.c.l.b16 %v2397
    %v2607 = vunpack.c.h.b16 %v2397
    %v2608 = vunpack.c.l.b16 %v2398
    %v2609 = vunpack.c.h.b16 %v2398
    %v2610 = vunpack.c.l.b16 %v2399
    %v2611 = vunpack.c.h.b16 %v2399
    %v2612 = vunpack.c.l.b16 %v2400
    %v2613 = vunpack.c.h.b16 %v2400
    %v2614 = vunpack.c.l.b16 %v2401
    %v2615 = vunpack.c.h.b16 %v2401
    %v2616 = vunpack.c.l.b16 %v2402
    %v2617 = vunpack.c.h.b16 %v2402
    %v2618 = vunpack.c.l.b16 %v2403
    %v2619 = vunpack.c.h.b16 %v2403
    %v2620 = vunpack.c.l.b16 %v2404
    %v2621 = vunpack.c.h.b16 %v2404
    %v2622 = vunpack.c.l.b16 %v2405
    %v2623 = vunpack.c.h.b16 %v2405
    %v2624 = vunpack.c.l.b16 %v2406
    %v2625 = vunpack.c.h.b16 %v2406
    %v2626 = vunpack.c.l.b16 %v2407
    %v2627 = vunpack.c.h.b16 %v2407
    %v2628 = vunpack.c.l.b16 %v2408
    %v2629 = vunpack.c.h.b16 %v2408
    %v2630 = vunpack.c.l.b16 %v2409
    %v2631 = vunpack.c.h.b16 %v2409
    %v2632 = vunpack.c.l.b16 %v2410
    %v2633 = vunpack.c.h.b16 %v2410
    %v2634 = vunpack.c.l.b16 %v2411
    %v2635 = vunpack.c.h.b16 %v2411
    %v2636 = vunpack.c.l.b16 %v2412
    %v2637 = vunpack.c.h.b16 %v2412
    %v2638 = vunpack.c.l.b16 %v2413
    %v2639 = vunpack.c.h.b16 %v2413
    %v2640 = vunpack.c.l.b16 %v2414
    %v2641 = vunpack.c.h.b16 %v2414
    %v2642 = vunpack.c.l.b16 %v2415
    %v2643 = vunpack.c.h.b16 %v2415
    %v2644 = vunpack.c.l.b16 %v2416
    %v2645 = vunpack.c.h.b16 %v2416
    %v2646 = vunpack.c.l.b16 %v2417
    %v2647 = vunpack.c.h.b16 %v2417
    %v2648 = vunpack.c.l.b16 %v2418
    %v2649 = vunpack.c.h.b16 %v2418
    %v2650 = vunpack.c.l.b16 %v2419
    %v2651 = vunpack.c.h.b16 %v2419
    %v2652 = vunpack.c.l.b16 %v2420
    %v2653 = vunpack.c.h.b16 %v2420
    %v2654 = vunpack.c.l.b16 %v2421
    %v2655 = vunpack.c.h.b16 %v2421
    %v2656 = vunpack.c.l.b16 %v2422
    %v2657 = vunpack.c.h.b16 %v2422
    %v2658 = vunpack.c.l.b16 %v2423
    %v2659 = vunpack.c.h.b16 %v2423
    %v2660 = vunpack.c.l.b16 %v2424
    %v2661 = vunpack.c.h.b16 %v2424
    %v2662 = vunpack.c.l.b16 %v2425
    %v2663 = vunpack.c.h.b16 %v2425
    %v2664 = vunpack.c.l.b16 %v2426
    %v2665 = vunpack.c.h.b16 %v2426
    %v2666 = vunpack.c.l.b16 %v2427
    %v2667 = vunpack.c.h.b16 %v2427
    %v2668 = vunpack.c.l.b16 %v2428
    %v2669 = vunpack.c.h.b16 %v2428
    %v2670 = vunpack.c.l.b16 %v2429
    %v2671 = vunpack.c.h.b16 %v2429
    %v2672 = vunpack.c.l.b16 %v2430
    %v2673 = vunpack.c.h.b16 %v2430
    %v2674 = vunpack.c.l.b16 %v2431
    %v2675 = vunpack.c.h.b16 %v2431
    %v2676 = vunpack.c.l.b16 %v2432
    %v2677 = vunpack.c.h.b16 %v2432
    %v2678 = vunpack.c.l.b16 %v2433
    %v2679 = vunpack.c.h.b16 %v2433
    %v2680 = vunpack.c.l.b16 %v2434
    %v2681 = vunpack.c.h.b16 %v2434
    %v2682 = vunpack.c.l.b16 %v2435
    %v2683 = vunpack.c.h.b16 %v2435
    %v2684 = vunpack.c.l.b16 %v2436
    %v2685 = vunpack.c.h.b16 %v2436
    %v2686 = vunpack.c.l.b16 %v2437
    %v2687 = vunpack.c.h.b16 %v2437
    %v2688 = vunpack.c.l.b16 %v2438
    %v2689 = vunpack.c.h.b16 %v2438
    %v2690 = vunpack.c.l.b16 %v2439
    %v2691 = vunpack.c.h.b16 %v2439
    %v2692 = vunpack.c.l.b16 %v2440
    %v2693 = vunpack.c.h.b16 %v2440
    %v2694 = vunpack.c.l.b16 %v2441
    %v2695 = vunpack.c.h.b16 %v2441
    %v2696 = vunpack.c.l.b16 %v2442
    %v2697 = vunpack.c.h.b16 %v2442
    %v2698 = vunpack.c.l.b16 %v2443
    %v2699 = vunpack.c.h.b16 %v2443
    %v2700 = vunpack.c.l.b16 %v2444
    %v2701 = vunpack.c.h.b16 %v2444
    %v2702 = vunpack.c.l.b16 %v2445
    %v2703 = vunpack.c.h.b16 %v2445
    %v2704 = vunpack.c.l.b16 %v2446
    %v2705 = vunpack.c.h.b16 %v2446
    %v2706 = vunpack.c.l.b16 %v2447
    %v2707 = vunpack.c.h.b16 %v2447
    %v2708 = vunpack.c.l.b16 %v2448
    %v2709 = vunpack.c.h.b16 %v2448
    %v2710 = vunpack.c.l.b16 %v2449
    %v2711 = vunpack.c.h.b16 %v2449
    %v2712 = vunpack.c.l.b16 %v2450
    %v2713 = vunpack.c.h.b16 %v2450
    %v2714 = vunpack.c.l.b16 %v2451
    %v2715 = vunpack.c.h.b16 %v2451
    %v2716 = vunpack.c.l.b16 %v2452
    %v2717 = vunpack.c.h.b16 %v2452
    %v2718 = vunpack.c.l.b16 %v2453
    %v2719 = vunpack.c.h.b16 %v2453
    %v2720 = vunpack.c.l.b16 %v2454
    %v2721 = vunpack.c.h.b16 %v2454
    %v2722 = vunpack.c.l.b16 %v2455
    %v2723 = vunpack.c.h.b16 %v2455
    %v2724 = vunpack.c.l.b16 %v2456
    %v2725 = vunpack.c.h.b16 %v2456
    %v2726 = vunpack.c.l.b16 %v2457
    %v2727 = vunpack.c.h.b16 %v2457
    %v2728 = vunpack.c.l.b16 %v2458
    %v2729 = vunpack.c.h.b16 %v2458
    %v2730 = vunpack.c.l.b16 %v2459
    %v2731 = vunpack.c.h.b16 %v2459
    %v2732 = vunpack.c.l.b16 %v2460
    %v2733 = vunpack.c.h.b16 %v2460
    %v2734 = vunpack.c.l.b16 %v2461
    %v2735 = vunpack.c.h.b16 %v2461
    %v2736 = vunpack.c.l.b16 %v2462
    %v2737 = vunpack.c.h.b16 %v2462
    %v2738 = vunpack.c.l.b16 %v2463
    %v2739 = vunpack.c.h.b16 %v2463
    %v2740 = vunpack.c.l.b16 %v2464
    %v2741 = vunpack.c.h.b16 %v2464
    %v2742 = vunpack.c.l.b16 %v2465
    %v2743 = vunpack.c.h.b16 %v2465
    %v2744 = vunpack.c.l.b16 %v2466
    %v2745 = vunpack.c.h.b16 %v2466
    %v2746 = vunpack.c.l.b16 %v2467
    %v2747 = vunpack.c.h.b16 %v2467
    %v2748 = vunpack.c.l.b16 %v2468
    %v2749 = vunpack.c.h.b16 %v2468
    %v2750 = vunpack.c.l.b16 %v2469
    %v2751 = vunpack.c.h.b16 %v2469
    %v2752 = vunpack.c.l.b16 %v2470
    %v2753 = vunpack.c.h.b16 %v2470
    %v2754 = vunpack.c.l.b16 %v2471
    %v2755 = vunpack.c.h.b16 %v2471
    %v2756 = vunpack.c.l.b16 %v2472
    %v2757 = vunpack.c.h.b16 %v2472
    %v2758 = vunpack.c.l.b16 %v2473
    %v2759 = vunpack.c.h.b16 %v2473
    %v2760 = vunpack.c.l.b16 %v2474
    %v2761 = vunpack.c.h.b16 %v2474
    %v2762 = vunpack.c.l.b16 %v2475
    %v2763 = vunpack.c.h.b16 %v2475
    %v2764 = vunpack.c.l.b16 %v2476
    %v2765 = vunpack.c.h.b16 %v2476
    %v2766 = vunpack.c.l.b16 %v2477
    %v2767 = vunpack.c.h.b16 %v2477
    %v2768 = vpack.c.b16 %v2578, %v2576
    %v2769 = vpack.c.b16 %v2579, %v2577
    %v2770 = vpack.c.b16 %v2582, %v2580
    %v2771 = vpack.c.b16 %v2583, %v2581
    %v2772 = vpack.c.b16 %v2586, %v2584
    %v2773 = vpack.c.b16 %v2587, %v2585
    %v2774 = vpack.c.b16 %v2590, %v2588
    %v2775 = vpack.c.b16 %v2591, %v2589
    %v2776 = vpack.c.b16 %v2594, %v2592
    %v2777 = vpack.c.b16 %v2595, %v2593
    %v2778 = vpack.c.b16 %v2598, %v2596
    %v2779 = vpack.c.b16 %v2599, %v2597
    %v2780 = vpack.c.b16 %v2602, %v2600
    %v2781 = vpack.c.b16 %v2603, %v2601
    %v2782 = vpack.c.b16 %v2606, %v2604
    %v2783 = vpack.c.b16 %v2607, %v2605
    %v2784 = vpack.c.b16 %v2610, %v2608
    %v2785 = vpack.c.b16 %v2611, %v2609
    %v2786 = vpack.c.b16 %v2614, %v2612
    %v2787 = vpack.c.b16 %v2615, %v2613
    %v2788 = vpack.c.b16 %v2618, %v2616
    %v2789 = vpack.c.b16 %v2619, %v2617
    %v2790 = vpack.c.b16 %v2622, %v2620
    %v2791 = vpack.c.b16 %v2623, %v2621
    %v2792 = vpack.c.b16 %v2626, %v2624
    %v2793 = vpack.c.b16 %v2627, %v2625
    %v2794 = vpack.c.b16 %v2630, %v2628
    %v2795 = vpack.c.b16 %v2631, %v2629
    %v2796 = vpack.c.b16 %v2634, %v2632
    %v2797 = vpack.c.b16 %v2635, %v2633
    %v2798 = vpack.c.b16 %v2638, %v2636
    %v2799 = vpack.c.b16 %v2639, %v2637
    %v2800 = vpack.c.b16 %v2642, %v2640
    %v2801 = vpack.c.b16 %v2643, %v2641
    %v2802 = vpack.c.b16 %v2646, %v2644
    %v2803 = vpack.c.b16 %v2647, %v2645
    %v2804 = vpack.c.b16 %v2650, %v2648
    %v2805 = vpack.c.b16 %v2651, %v2649
    %v2806 = vpack.c.b16 %v2654, %v2652
    %v2807 = vpack.c.b16 %v2655, %v2653
    %v2808 = vpack.c.b16 %v2658, %v2656
    %v2809 = vpack.c.b16 %v2659, %v2657
    %v2810 = vpack.c.b16 %v2662, %v2660
    %v2811 = vpack.c.b16 %v2663, %v2661
    %v2812 = vpack.c.b16 %v2666, %v2664
    %v2813 = vpack.c.b16 %v2667, %v2665
    %v2814 = vpack.c.b16 %v2670, %v2668
    %v2815 = vpack.c.b16 %v2671, %v2669
    %v2816 = vpack.c.b16 %v2674, %v2672
    %v2817 = vpack.c.b16 %v2675, %v2673
    %v2818 = vpack.c.b16 %v2678, %v2676
    %v2819 = vpack.c.b16 %v2679, %v2677
    %v2820 = vpack.c.b16 %v2682, %v2680
    %v2821 = vpack.c.b16 %v2683, %v2681
    %v2822 = vpack.c.b16 %v2686, %v2684
    %v2823 = vpack.c.b16 %v2687, %v2685
    %v2824 = vpack.c.b16 %v2690, %v2688
    %v2825 = vpack.c.b16 %v2691, %v2689
    %v2826 = vpack.c.b16 %v2694, %v2692
    %v2827 = vpack.c.b16 %v2695, %v2693
    %v2828 = vpack.c.b16 %v2698, %v2696
    %v2829 = vpack.c.b16 %v2699, %v2697
    %v2830 = vpack.c.b16 %v2702, %v2700
    %v2831 = vpack.c.b16 %v2703, %v2701
    %v2832 = vpack.c.b16 %v2706, %v2704
    %v2833 = vpack.c.b16 %v2707, %v2705
    %v2834 = vpack.c.b16 %v2710, %v2708
    %v2835 = vpack.c.b16 %v2711, %v2709
    %v2836 = vpack.c.b16 %v2714, %v2712
    %v2837 = vpack.c.b16 %v2715, %v2713
    %v2838 = vpack.c.b16 %v2718, %v2716
    %v2839 = vpack.c.b16 %v2719, %v2717
    %v2840 = vpack.c.b16 %v2722, %v2720
    %v2841 = vpack.c.b16 %v2723, %v2721
    %v2842 = vpack.c.b16 %v2726, %v2724
    %v2843 = vpack.c.b16 %v2727, %v2725
    %v2844 = vpack.c.b16 %v2730, %v2728
    %v2845 = vpack.c.b16 %v2731, %v2729
    %v2846 = vpack.c.b16 %v2734, %v2732
    %v2847 = vpack.c.b16 %v2735, %v2733
    %v2848 = vpack.c.b16 %v2738, %v2736
    %v2849 = vpack.c.b16 %v2739, %v2737
    %v2850 = vpack.c.b16 %v2742, %v2740
    %v2851 = vpack.c.b16 %v2743, %v2741
    %v2852 = vpack.c.b16 %v2746, %v2744
    %v2853 = vpack.c.b16 %v2747, %v2745
    %v2854 = vpack.c.b16 %v2750, %v2748
    %v2855 = vpack.c.b16 %v2751, %v2749
    %v2856 = vpack.c.b16 %v2754, %v2752
    %v2857 = vpack.c.b16 %v2755, %v2753
    %v2858 = vpack.c.b16 %v2758, %v2756
    %v2859 = vpack.c.b16 %v2759, %v2757
    %v2860 = vpack.c.b16 %v2762, %v2760
    %v2861 = vpack.c.b16 %v2763, %v2761
    %v2862 = vpack.c.b16 %v2766, %v2764
    %v2863 = vpack.c.b16 %v2767, %v2765
    %2961 = vst [vmem:[#allocation1] ss:$4 sm:$0xff] %v2479
    %v2962 = vld.sshfl [vmem:[#allocation1] sm:$0xff pattern:$0x73625140]
    %v2963 = vld.sshfl [vmem:[#allocation1 + $0x8] sm:$0xff pattern:$0x73625140]
    %2966 = vmatpush.bf16.msra.mxu0 %v2782
    %2967 = vmatpush.bf16.msra.mxu0 %v2780
    %2968 = vmatpush.bf16.msra.mxu0 %v2778
    %2969 = vmatpush.bf16.msra.mxu0 %v2776
    %2970 = vmatpush.bf16.msra.mxu0 %v2774
    %2971 = vmatpush.bf16.msra.mxu0 %v2772
    %2972 = vmatpush.bf16.msra.mxu0 %v2770
    %2973 = vmatpush.bf16.msra.mxu0 %v2768
    %2974 = vmatmul.bf16.gmra.mxu0 %v2376
    %v2975 = vpop.f32.mrf.mxu0
    %v2976 = vadd.f32 %v2962, %v2975
    %v2977 = vpop.f32.mrf.mxu0
    %2978 = vdwg.mxu0
    %2979 = vmatpush.bf16.msra.mxu0 %v2798
    %2980 = vmatpush.bf16.msra.mxu0 %v2796
    %2981 = vmatpush.bf16.msra.mxu0 %v2794
    %2982 = vmatpush.bf16.msra.mxu0 %v2792
    %2983 = vmatpush.bf16.msra.mxu0 %v2790
    %2984 = vmatpush.bf16.msra.mxu0 %v2788
    %2985 = vmatpush.bf16.msra.mxu0 %v2786
    %2986 = vmatpush.bf16.msra.mxu0 %v2784
    %2987 = vmatmul.bf16.gmra.mxu0 %v2377
    %v2988 = vpop.f32.mrf.mxu0
    %v2989 = vadd.f32 %v2976, %v2988
    %v2990 = vpop.f32.mrf.mxu0
    %2991 = vdwg.mxu0
    %2992 = vmatpush.bf16.msra.mxu0 %v2814
    %2993 = vmatpush.bf16.msra.mxu0 %v2812
    %2994 = vmatpush.bf16.msra.mxu0 %v2810
    %2995 = vmatpush.bf16.msra.mxu0 %v2808
    %2996 = vmatpush.bf16.msra.mxu0 %v2806
    %2997 = vmatpush.bf16.msra.mxu0 %v2804
    %2998 = vmatpush.bf16.msra.mxu0 %v2802
    %2999 = vmatpush.bf16.msra.mxu0 %v2800
    %3000 = vmatmul.bf16.gmra.mxu0 %v2378
    %v3001 = vpop.f32.mrf.mxu0
    %v3002 = vadd.f32 %v2989, %v3001
    %v3003 = vpop.f32.mrf.mxu0
    %3004 = vdwg.mxu0
    %3005 = vmatpush.bf16.msra.mxu0 %v2830
    %3006 = vmatpush.bf16.msra.mxu0 %v2828
    %3007 = vmatpush.bf16.msra.mxu0 %v2826
    %3008 = vmatpush.bf16.msra.mxu0 %v2824
    %3009 = vmatpush.bf16.msra.mxu0 %v2822
    %3010 = vmatpush.bf16.msra.mxu0 %v2820
    %3011 = vmatpush.bf16.msra.mxu0 %v2818
    %3012 = vmatpush.bf16.msra.mxu0 %v2816
    %3013 = vmatmul.bf16.gmra.mxu0 %v2379
    %v3014 = vpop.f32.mrf.mxu0
    %v3015 = vadd.f32 %v3002, %v3014
    %v3016 = vpop.f32.mrf.mxu0
    %3017 = vdwg.mxu0
    %3018 = vmatpush.bf16.msra.mxu0 %v2846
    %3019 = vmatpush.bf16.msra.mxu0 %v2844
    %3020 = vmatpush.bf16.msra.mxu0 %v2842
    %3021 = vmatpush.bf16.msra.mxu0 %v2840
    %3022 = vmatpush.bf16.msra.mxu0 %v2838
    %3023 = vmatpush.bf16.msra.mxu0 %v2836
    %3024 = vmatpush.bf16.msra.mxu0 %v2834
    %3025 = vmatpush.bf16.msra.mxu0 %v2832
    %3026 = vmatmul.bf16.gmra.mxu0 %v2380
    %v3027 = vpop.f32.mrf.mxu0
    %v3028 = vadd.f32 %v3015, %v3027
    %v3029 = vpop.f32.mrf.mxu0
    %3030 = vdwg.mxu0
    %3031 = vmatpush.bf16.msra.mxu0 %v2862
    %3032 = vmatpush.bf16.msra.mxu0 %v2860
    %3033 = vmatpush.bf16.msra.mxu0 %v2858
    %3034 = vmatpush.bf16.msra.mxu0 %v2856
    %3035 = vmatpush.bf16.msra.mxu0 %v2854
    %3036 = vmatpush.bf16.msra.mxu0 %v2852
    %3037 = vmatpush.bf16.msra.mxu0 %v2850
    %3038 = vmatpush.bf16.msra.mxu0 %v2848
    %3039 = vmatmul.bf16.gmra.mxu0 %v2381
    %v3040 = vpop.f32.mrf.mxu0
    %v3041 = vadd.f32 %v3028, %v3040
    %v3042 = vpop.f32.mrf.mxu0
    %3043 = vdwg.mxu0
    %3044 = vmatpush.bf16.msra.mxu0 %v2783
    %3045 = vmatpush.bf16.msra.mxu0 %v2781
    %3046 = vmatpush.bf16.msra.mxu0 %v2779
    %3047 = vmatpush.bf16.msra.mxu0 %v2777
    %3048 = vmatpush.bf16.msra.mxu0 %v2775
    %3049 = vmatpush.bf16.msra.mxu0 %v2773
    %3050 = vmatpush.bf16.msra.mxu0 %v2771
    %3051 = vmatpush.bf16.msra.mxu0 %v2769
    %3052 = vmatmul.bf16.gmra.mxu0 %v2376
    %v3053 = vpop.f32.mrf.mxu0
    %v3054 = vadd.f32 %v2963, %v3053
    %v3055 = vpop.f32.mrf.mxu0
    %3056 = vdwg.mxu0
    %3057 = vmatpush.bf16.msra.mxu0 %v2799
    %3058 = vmatpush.bf16.msra.mxu0 %v2797
    %3059 = vmatpush.bf16.msra.mxu0 %v2795
    %3060 = vmatpush.bf16.msra.mxu0 %v2793
    %3061 = vmatpush.bf16.msra.mxu0 %v2791
    %3062 = vmatpush.bf16.msra.mxu0 %v2789
    %3063 = vmatpush.bf16.msra.mxu0 %v2787
    %3064 = vmatpush.bf16.msra.mxu0 %v2785
    %3065 = vmatmul.bf16.gmra.mxu0 %v2377
    %v3066 = vpop.f32.mrf.mxu0
    %v3067 = vadd.f32 %v3054, %v3066
    %v3068 = vpop.f32.mrf.mxu0
    %3069 = vdwg.mxu0
    %3070 = vmatpush.bf16.msra.mxu0 %v2815
    %3071 = vmatpush.bf16.msra.mxu0 %v2813
    %3072 = vmatpush.bf16.msra.mxu0 %v2811
    %3073 = vmatpush.bf16.msra.mxu0 %v2809
    %3074 = vmatpush.bf16.msra.mxu0 %v2807
    %3075 = vmatpush.bf16.msra.mxu0 %v2805
    %3076 = vmatpush.bf16.msra.mxu0 %v2803
    %3077 = vmatpush.bf16.msra.mxu0 %v2801
    %3078 = vmatmul.bf16.gmra.mxu0 %v2378
    %v3079 = vpop.f32.mrf.mxu0
    %v3080 = vadd.f32 %v3067, %v3079
    %v3081 = vpop.f32.mrf.mxu0
    %3082 = vdwg.mxu0
    %3083 = vmatpush.bf16.msra.mxu0 %v2831
    %3084 = vmatpush.bf16.msra.mxu0 %v2829
    %3085 = vmatpush.bf16.msra.mxu0 %v2827
    %3086 = vmatpush.bf16.msra.mxu0 %v2825
    %3087 = vmatpush.bf16.msra.mxu0 %v2823
    %3088 = vmatpush.bf16.msra.mxu0 %v2821
    %3089 = vmatpush.bf16.msra.mxu0 %v2819
    %3090 = vmatpush.bf16.msra.mxu0 %v2817
    %3091 = vmatmul.bf16.gmra.mxu0 %v2379
    %v3092 = vpop.f32.mrf.mxu0
    %v3093 = vadd.f32 %v3080, %v3092
    %v3094 = vpop.f32.mrf.mxu0
    %3095 = vdwg.mxu0
    %3096 = vmatpush.bf16.msra.mxu0 %v2847
    %3097 = vmatpush.bf16.msra.mxu0 %v2845
    %3098 = vmatpush.bf16.msra.mxu0 %v2843
    %3099 = vmatpush.bf16.msra.mxu0 %v2841
    %3100 = vmatpush.bf16.msra.mxu0 %v2839
    %3101 = vmatpush.bf16.msra.mxu0 %v2837
    %3102 = vmatpush.bf16.msra.mxu0 %v2835
    %3103 = vmatpush.bf16.msra.mxu0 %v2833
    %3104 = vmatmul.bf16.gmra.mxu0 %v2380
    %v3105 = vpop.f32.mrf.mxu0
    %v3106 = vadd.f32 %v3093, %v3105
    %v3107 = vpop.f32.mrf.mxu0
    %3108 = vdwg.mxu0
    %3109 = vmatpush.bf16.msra.mxu0 %v2863
    %3110 = vmatpush.bf16.msra.mxu0 %v2861
    %3111 = vmatpush.bf16.msra.mxu0 %v2859
    %3112 = vmatpush.bf16.msra.mxu0 %v2857
    %3113 = vmatpush.bf16.msra.mxu0 %v2855
    %3114 = vmatpush.bf16.msra.mxu0 %v2853
    %3115 = vmatpush.bf16.msra.mxu0 %v2851
    %3116 = vmatpush.bf16.msra.mxu0 %v2849
    %3117 = vmatmul.bf16.gmra.mxu0 %v2381
    %v3118 = vpop.f32.mrf.mxu0
    %v3119 = vadd.f32 %v3106, %v3118
    %v3120 = vpop.f32.mrf.mxu0
    %3121 = vdwg.mxu0
    %v3122 = vld [vmem:[#allocation11] sm:$0x3]
    %v3124 = vperm.slane %v3122, 0
    %v3125 = vperm.slane %v3122, 1
    %v3128 = vadd.f32 %v3041, %v3124
    %v3129 = vadd.f32 %v3119, %v3125
    %vm3130 = vcmask 1041408
    %v3131 = vsel %vm3130, %v3128, 0.0
    %v3132 = vsel %vm3130, %v3129, 0.0
    %v3133 = vadd.f32 %v3131, %v3132
    %3134 = vadd.xlane.f32.xlu0 %v3133
    %v3135 = vpop.xlane.xlu0 %3134
    %v3136 = vrcp.pop 256.0
    %v3137 = vmul.f32 256.0, %v3136
    %v3138 = vsub.f32 1.0, %v3137
    %v3139 = vmul.f32 %v3136, %v3138
    %v3140 = vadd.f32 %v3136, %v3139
    %vm3141 = vweird.f32 %v3136
    %v3142 = vsel %vm3141, %v3136, %v3140
    %v3143 = vmul.f32 %v3135, %v3142
    %v3144 = vsub.f32 %v3128, %v3143
    %v3145 = vsub.f32 %v3129, %v3143
    %v3146 = vmul.f32 %v3144, %v3144
    %v3147 = vmul.f32 %v3145, %v3145
    %v3148 = vsel %vm3130, %v3146, 0.0
    %v3149 = vsel %vm3130, %v3147, 0.0
    %v3150 = vadd.f32 %v3148, %v3149
    %3151 = vadd.xlane.f32.xlu0 %v3150
    %v3152 = vpop.xlane.xlu0 %3151
    %v3153 = vmul.f32 %v3152, %v3142
    %v3154 = vadd.f32 %v3153, 1e-05
    %v3155 = vrsqrt.pop %v3154
    %v3156 = vmul.f32 %v3155, %v3154
    %v3157 = vmul.f32 %v3156, %v3155
    %v3158 = vmul.f32 0.5, %v3157
    %v3159 = vsub.f32 1.5, %v3158
    %v3160 = vmul.f32 %v3155, %v3159
    %vm3161 = vweird.f32 %v3154
    %vm3162 = vweird.f32 %v3155
    %vm3163 = vmor %vm3161, %vm3162
    %v3164 = vsel %vm3163, %v3155, %v3160
    %v3165 = vmul.f32 %v3144, %v3164
    %v3166 = vmul.f32 %v3145, %v3164
    %v3167 = vpack.c.bf16 %v3165, %v3165
    %v3168 = vpack.c.bf16 %v3166, %v3166
    %v3169 = vld [vmem:[#allocation13] sm:$0xf]
    %v3170 = vld [vmem:[#allocation13 + $0x4] sm:$0xf]
    %v3171 = vld [vmem:[#allocation13 + $0x8] sm:$0xf]
    %v3172 = vld [vmem:[#allocation13 + $0xc] sm:$0xf]
    %v3173 = vld [vmem:[#allocation13 + $0x10] sm:$0xf]
    %v3174 = vld [vmem:[#allocation13 + $0x14] sm:$0xf]
    %v3175 = vld [vmem:[#allocation13 + $0x18] sm:$0xf]
    %v3176 = vld [vmem:[#allocation13 + $0x1c] sm:$0xf]
    %v3177 = vld [vmem:[#allocation13 + $0x20] sm:$0xf]
    %v3178 = vld [vmem:[#allocation13 + $0x24] sm:$0xf]
    %v3179 = vld [vmem:[#allocation13 + $0x28] sm:$0xf]
    %v3180 = vld [vmem:[#allocation13 + $0x2c] sm:$0xf]
    %v3181 = vld [vmem:[#allocation13 + $0x30] sm:$0xf]
    %v3182 = vld [vmem:[#allocation13 + $0x34] sm:$0xf]
    %v3183 = vld [vmem:[#allocation13 + $0x38] sm:$0xf]
    %v3184 = vld [vmem:[#allocation13 + $0x3c] sm:$0xf]
    %v3185 = vld [vmem:[#allocation13 + $0x40] sm:$0xf]
    %v3186 = vld [vmem:[#allocation13 + $0x44] sm:$0xf]
    %v3187 = vld [vmem:[#allocation13 + $0x48] sm:$0xf]
    %v3188 = vld [vmem:[#allocation13 + $0x4c] sm:$0xf]
    %v3189 = vld [vmem:[#allocation13 + $0x50] sm:$0xf]
    %v3190 = vld [vmem:[#allocation13 + $0x54] sm:$0xf]
    %v3191 = vld [vmem:[#allocation13 + $0x58] sm:$0xf]
    %v3192 = vld [vmem:[#allocation13 + $0x5c] sm:$0xf]
    %v3193 = vld [vmem:[#allocation13 + $0x60] sm:$0xf]
    %v3194 = vld [vmem:[#allocation13 + $0x64] sm:$0xf]
    %v3195 = vld [vmem:[#allocation13 + $0x68] sm:$0xf]
    %v3196 = vld [vmem:[#allocation13 + $0x6c] sm:$0xf]
    %v3197 = vld [vmem:[#allocation13 + $0x70] sm:$0xf]
    %v3198 = vld [vmem:[#allocation13 + $0x74] sm:$0xf]
    %v3199 = vld [vmem:[#allocation13 + $0x78] sm:$0xf]
    %v3200 = vld [vmem:[#allocation13 + $0x7c] sm:$0xf]
    %v3201 = vld [vmem:[#allocation14] sm:$0x1]
    %v3203 = vperm.slane %v3201, 0
    %v3237 = vunpack.c.l.b16 %v3169
    %v3238 = vunpack.c.l.b16 %v3170
    %v3239 = vunpack.c.l.b16 %v3171
    %v3240 = vunpack.c.l.b16 %v3172
    %v3241 = vunpack.c.l.b16 %v3173
    %v3242 = vunpack.c.l.b16 %v3174
    %v3243 = vunpack.c.l.b16 %v3175
    %v3244 = vunpack.c.l.b16 %v3176
    %v3245 = vunpack.c.l.b16 %v3177
    %v3246 = vunpack.c.l.b16 %v3178
    %v3247 = vunpack.c.l.b16 %v3179
    %v3248 = vunpack.c.l.b16 %v3180
    %v3249 = vunpack.c.l.b16 %v3181
    %v3250 = vunpack.c.l.b16 %v3182
    %v3251 = vunpack.c.l.b16 %v3183
    %v3252 = vunpack.c.l.b16 %v3184
    %v3253 = vunpack.c.l.b16 %v3185
    %v3254 = vunpack.c.l.b16 %v3186
    %v3255 = vunpack.c.l.b16 %v3187
    %v3256 = vunpack.c.l.b16 %v3188
    %v3257 = vunpack.c.l.b16 %v3189
    %v3258 = vunpack.c.l.b16 %v3190
    %v3259 = vunpack.c.l.b16 %v3191
    %v3260 = vunpack.c.l.b16 %v3192
    %v3261 = vunpack.c.l.b16 %v3193
    %v3262 = vunpack.c.l.b16 %v3194
    %v3263 = vunpack.c.l.b16 %v3195
    %v3264 = vunpack.c.l.b16 %v3196
    %v3265 = vunpack.c.l.b16 %v3197
    %v3266 = vunpack.c.l.b16 %v3198
    %v3267 = vunpack.c.l.b16 %v3199
    %v3268 = vunpack.c.l.b16 %v3200
    %v3269 = vpack.c.b16 %v3238, %v3237
    %v3270 = vpack.c.b16 %v3240, %v3239
    %v3271 = vpack.c.b16 %v3242, %v3241
    %v3272 = vpack.c.b16 %v3244, %v3243
    %v3273 = vpack.c.b16 %v3246, %v3245
    %v3274 = vpack.c.b16 %v3248, %v3247
    %v3275 = vpack.c.b16 %v3250, %v3249
    %v3276 = vpack.c.b16 %v3252, %v3251
    %v3277 = vpack.c.b16 %v3254, %v3253
    %v3278 = vpack.c.b16 %v3256, %v3255
    %v3279 = vpack.c.b16 %v3258, %v3257
    %v3280 = vpack.c.b16 %v3260, %v3259
    %v3281 = vpack.c.b16 %v3262, %v3261
    %v3282 = vpack.c.b16 %v3264, %v3263
    %v3283 = vpack.c.b16 %v3266, %v3265
    %v3284 = vpack.c.b16 %v3268, %v3267
    %3301 = vmatpush.bf16.msra.mxu0 %v3276
    %3302 = vmatpush.bf16.msra.mxu0 %v3275
    %3303 = vmatpush.bf16.msra.mxu0 %v3274
    %3304 = vmatpush.bf16.msra.mxu0 %v3273
    %3305 = vmatpush.bf16.msra.mxu0 %v3272
    %3306 = vmatpush.bf16.msra.mxu0 %v3271
    %3307 = vmatpush.bf16.msra.mxu0 %v3270
    %3308 = vmatpush.bf16.msra.mxu0 %v3269
    %3309 = vmatmul.bf16.gmra.mxu0 %v3167
    %v3310 = vpop.f32.mrf.mxu0
    %v3311 = vadd.f32 %v3203, %v3310
    %v3312 = vpop.f32.mrf.mxu0
    %3313 = vdwg.mxu0
    %3314 = vmatpush.bf16.msra.mxu0 %v3284
    %3315 = vmatpush.bf16.msra.mxu0 %v3283
    %3316 = vmatpush.bf16.msra.mxu0 %v3282
    %3317 = vmatpush.bf16.msra.mxu0 %v3281
    %3318 = vmatpush.bf16.msra.mxu0 %v3280
    %3319 = vmatpush.bf16.msra.mxu0 %v3279
    %3320 = vmatpush.bf16.msra.mxu0 %v3278
    %3321 = vmatpush.bf16.msra.mxu0 %v3277
    %3322 = vmatmul.bf16.gmra.mxu0 %v3168
    %v3323 = vpop.f32.mrf.mxu0
    %v3324 = vadd.f32 %v3311, %v3323
    %v3325 = vpop.f32.mrf.mxu0
    %3326 = vdwg.mxu0
    %v3327 = vsel %vm3130, %v3324, -inf
    %3328 = vmax.xlane.f32.xlu0 %v3327
    %v3329 = vpop.xlane.xlu0 %3328
    %v3330 = vsub.f32 %v3324, %v3329
    %v3331 = vmul.f32 %v3330, 1.442695
    %v3332 = vpow.pop %v3331
    %v3333 = vsel %vm3130, %v3332, 0.0
    %3334 = vadd.xlane.f32.xlu0 %v3333
    %v3335 = vpop.xlane.xlu0 %3334
    %v3336 = vrcp.pop %v3335
    %v3337 = vmul.f32 %v3335, %v3336
    %v3338 = vsub.f32 1.0, %v3337
    %v3339 = vmul.f32 %v3336, %v3338
    %v3340 = vadd.f32 %v3336, %v3339
    %vm3341 = vweird.f32 %v3335
    %vm3342 = vweird.f32 %v3336
    %vm3343 = vmor %vm3341, %vm3342
    %v3344 = vsel %vm3343, %v3336, %v3340
    %v3345 = vand.u32 2147483647, %v3335
    %vm3346 = vcmp.eq.f32.partialorder %v3345, 8.507059e+37
    %v3347 = vand.u32 %v3335, 2147483648
    %v3348 = vor.u32 1.1754944e-38, %v3347
    %v3349 = vsel %vm3346, %v3348, %v3344
    %v3350 = vmul.f32 %v3332, %v3349
    %v3351 = vpack.c.bf16 %v3350, %v3350
    %3352 = vst [vmem:[#allocation16] sm:$0x1] %v3351
    // Predicated region
    $region66: #{tpu_custom_call.1} parent=1 // pred_check
      _
    $region67: #{tpu_custom_call.1} parent=1 // pred_check_branch
      %3354 = sbr.rel (0) target = $region69
    $region68: #{tpu_custom_call.1} parent=1 // pred_region
      %3356 = vsyncadd [#allocation4], 0
      %s3358 = sshll.u32 [#allocation16], 4
      %s3359 = int_to_ptr.vmem [resolvable:$true] %s3358
      %s3360 = sshll.u32 %s8, 4
      %s3361 = int_to_ptr.hbm [resolvable:$true] %s3360
      %3363 = dma.vmem_to_hbm [thread:$0]  %s3359, 16, %s3361, [#allocation4]
    $region69: #{tpu_custom_call.1} parent=1 // pred_fallthru
      _
    // Predicated region
    $region70: #{tpu_custom_call.1} parent=1 // pred_check
      _
    $region71: #{tpu_custom_call.1} parent=1 // pred_check_branch
      %3365 = sbr.rel (0) target = $region73
    $region72: #{tpu_custom_call.1} parent=1 // pred_region
      %3367 = dma.done [#allocation4], 16
    $region73: #{tpu_custom_call.1} parent=1 // pred_fallthru
      _
    %3368 = vsyncpa [#allocation3], 1
    %3369 = vsyncpa [#allocation6], 1
    %3370 = vsyncpa [#allocation9], 1
    %3371 = vsyncpa [#allocation12], 1
    %3372 = vsyncpa [#allocation15], 1
    %3373 = vsyncpa [#allocation4], 1

</llo_original>
